<compile_context>
chip_gen: v7x
topology: tpu7x:2x2x1
jax: 0.10.0
libtpu: 0.0.40
codegen_flags: <defaults>
</compile_context>

<pallas_src>
import functools

import numpy as np
import jax
import jax.numpy as jnp
from jax import lax
from jax.experimental import pallas as pl
from jax.experimental.pallas import tpu as pltpu


def _round_up(x, m):
    return (x + m - 1) // m * m


# --------------------------------------------------------------------------
# Pallas kernel: (TM, K) @ (K, N) matmul + bias + optional LeakyReLU
# --------------------------------------------------------------------------
def _matmul_bias_act_kernel(x_ref, w_ref, b_ref, o_ref, *, neg_slope, apply_act):
    """x_ref: (TM, K_pad) bf16, w_ref: (K_pad, N_pad) bf16,
    b_ref: (1, N_pad) f32, o_ref: (TM, N_pad) f32."""
    acc = jnp.dot(x_ref[...], w_ref[...], preferred_element_type=jnp.float32)
    acc = acc + b_ref[...]                                # f32 epilogue
    if apply_act:
        acc = jnp.where(acc >= 0.0, acc, jnp.float32(neg_slope) * acc)  # LeakyReLU
    o_ref[...] = acc.astype(o_ref.dtype)


def _pick_tm(m_pad, k_pad, n_pad, budget_bytes=12 * 1024 * 1024):
    """Pick the M-tile: prefer 512/256 rows (v6e MXU likes big M), keep the
    double-buffered working set well under the v7x scoped-VMEM budget."""
    tm = 128
    for cand in (512, 256):
        if m_pad % cand == 0 and m_pad >= 2 * cand:
            tm = cand
            break

    def per_step(t):
        # 2x for double-buffered input/output blocks + resident weight + bias.
        return 2 * (t * k_pad * 2 + t * n_pad * 4) + k_pad * n_pad * 2 + n_pad * 4

    while tm > 128 and per_step(tm) > budget_bytes:
        tm //= 2
    return tm


def conv3d_pallas(x, layer_p, layer_c, neg_slope):
    """x: (B, D, H, W, Cin) f32 (channels-last).  Returns (B, OD, OH, OW, Cout) f32."""
    B, D, H, W, Cin = x.shape
    KD, KH, KW = layer_c["kernel"]
    sd, sh, sw = layer_c["stride"]
    cout = layer_c["cout"]
    assert Cin == layer_c["cin"], (Cin, layer_c["cin"])

    OD = (D - KD) // sd + 1
    OH = (H - KH) // sh + 1
    OW = (W - KW) // sw + 1
    K = KD * KH * KW * Cin
    K_pad, N_pad = layer_p["w"].shape
    M = B * OD * OH * OW
    M_pad = _round_up(M, 128)
    TM = _pick_tm(M_pad, K_pad, N_pad)
    grid_m = M_pad // TM

    # im2col (plain-JAX layout plumbing): fold the taps into the contraction dim
    # so the kernel sees one MXU-shaped matmul instead of KD*KH*KW tiny K=Cin dots.
    xb = x.astype(jnp.bfloat16)
    patches = []
    for kd in range(KD):
        for kh in range(KH):
            for kw in range(KW):
                patches.append(
                    xb[:, kd:kd + (OD - 1) * sd + 1:sd,
                          kh:kh + (OH - 1) * sh + 1:sh,
                          kw:kw + (OW - 1) * sw + 1:sw, :])
    x_col = jnp.concatenate(patches, axis=-1).reshape(M, K)
    x_col = jnp.pad(x_col, ((0, M_pad - M), (0, K_pad - K)))    # lane/row padding

    kernel_fn = functools.partial(
        _matmul_bias_act_kernel,
        neg_slope=neg_slope,
        apply_act=neg_slope is not None)

    out = pl.pallas_call(
        kernel_fn,
        out_shape=jax.ShapeDtypeStruct((M_pad, N_pad), jnp.float32),
        grid=(grid_m,),
        in_specs=[
            pl.BlockSpec((TM, K_pad), lambda i: (i, 0)),       # activations: tiled over M
            pl.BlockSpec((K_pad, N_pad), lambda i: (0, 0)),    # weights: resident
            pl.BlockSpec((1, N_pad), lambda i: (0, 0)),        # bias: resident
        ],
        out_specs=pl.BlockSpec((TM, N_pad), lambda i: (i, 0)),  # lane-dense (N_pad % 128 == 0)
        compiler_params=pltpu.CompilerParams(
            dimension_semantics=("parallel",),                  # megacore on v7x
            vmem_limit_bytes=32 * 1024 * 1024),
    )(x_col, layer_p["w"], layer_p["b"])

    return out[:M, :cout].reshape(B, OD, OH, OW, cout)


# --------------------------------------------------------------------------
# Parameter construction (deterministic, synthetic — mirrors __init__ shapes)
# --------------------------------------------------------------------------
def _init_conv(key, cin, cout, kernel, stride):
    kd, kh, kw = kernel
    kkey, bkey = jax.random.split(key)
    w = jax.random.normal(kkey, (cout, cin, kd, kh, kw), jnp.float32) * 0.05
    b = jax.random.normal(bkey, (cout,), jnp.float32) * 0.05
    # Spectral norm: divide the (cout, cin*kd*kh*kw) matrix by its largest singular value.
    # TODO(synk): PyTorch spectral_norm uses one power iteration per forward with a
    # persistent random `u`; here we apply the exact largest singular value instead.
    sigma = np.linalg.svd(np.asarray(w).reshape(cout, -1), compute_uv=False)[0]
    w = w / jnp.float32(sigma)

    K = kd * kh * kw * cin
    K_pad = _round_up(K, 128)
    N_pad = _round_up(cout, 128)
    # (Cout, Cin, KD, KH, KW) -> (KD, KH, KW, Cin, Cout) -> (K, Cout), padded, bf16.
    w_col = jnp.transpose(w, (2, 3, 4, 1, 0)).reshape(K, cout)
    w_col = jnp.pad(w_col, ((0, K_pad - K), (0, N_pad - cout))).astype(jnp.bfloat16)
    b_col = jnp.pad(b, (0, N_pad - cout)).reshape(1, N_pad)          # f32
    p = {"w": w_col, "b": b_col}
    c = {"kernel": tuple(kernel), "stride": tuple(stride), "cin": cin, "cout": cout}
    return p, c


def init_temporal_discriminator_params(key, num_filters, img_size, temporal_window):
    in_channels = num_filters * 16
    base = 64
    if img_size[0] == 48 and img_size[1] == 80:
        k1, k2 = (2, 2, 4), (3, 2, 2)
    else:
        k1, k2 = (2, 2, 2), (3, 3, 3)

    stages_cfg = [(
        [(in_channels, base, k1, (1, 1, 1)), (base, base * 2, k2, (2, 1, 1))],
        (base * 2, 1, (2, 1, 1), (1, 1, 1)),
    )]
    if temporal_window >= 12:
        stages_cfg.append((
            [(base * 2, base * 4, (3, 1, 1), (1, 1, 1))],
            (base * 4, 1, (3, 1, 1), (1, 1, 1)),
        ))
    if temporal_window >= 18:
        stages_cfg.append((
            [(base * 4, base * 8, (3, 1, 1), (2, 1, 1))],
            (base * 8, 1, (4, 1, 1), (2, 1, 1)),
        ))

    params, config = [], []
    for layers_cfg, logit_cfg in stages_cfg:
        key, *lkeys = jax.random.split(key, len(layers_cfg) + 2)
        layer_p, layer_c = [], []
        for k, (cin, cout, ks, st) in zip(lkeys[:-1], layers_cfg):
            p, c = _init_conv(k, cin, cout, ks, st)
            layer_p.append(p)
            layer_c.append(c)
        cin, cout, ks, st = logit_cfg
        lg_p, lg_c = _init_conv(lkeys[-1], cin, cout, ks, st)
        params.append({"layers": layer_p, "logit": lg_p})
        config.append({"layers": layer_c, "logit": lg_c})
    return params, config


# --------------------------------------------------------------------------
# Forward pass (glue in plain JAX, hot path in Pallas)
# --------------------------------------------------------------------------
def _build_temporal_input(bottom_fmaps, num_warmup_frames, batch_size):
    # Mirrors: split head frames, skip, split tail frames, stack along temporal dim=2.
    N, C, H, W = bottom_fmaps.shape
    head = bottom_fmaps[:num_warmup_frames * batch_size]
    tail = bottom_fmaps[(2 * num_warmup_frames - 1) * batch_size:]
    frames = jnp.concatenate([head, tail], axis=0)          # (D*batch, C, H, W)
    D = frames.shape[0] // batch_size
    inp = frames.reshape(D, batch_size, C, H, W).transpose(1, 2, 0, 3, 4)  # (B,C,D,H,W)
    return inp


def temporal_discriminator_forward(params, config, bottom_fmaps, num_warmup_frames,
                                   batch_size, neg_slope):
    inp_ncdhw = _build_temporal_input(bottom_fmaps, num_warmup_frames, batch_size)
    x = jnp.transpose(inp_ncdhw, (0, 2, 3, 4, 1))            # -> NDHWC for the kernels
    preds = []
    for stage_p, stage_c in zip(params, config):
        for lp, lc in zip(stage_p["layers"], stage_c["layers"]):
            x = conv3d_pallas(x, lp, lc, neg_slope)
        p = conv3d_pallas(x, stage_p["logit"], stage_c["logit"], None)
        p_ncdhw = jnp.transpose(p, (0, 4, 1, 2, 3))          # back to NCDHW
        preds.append(p_ncdhw.reshape(batch_size, -1))        # pred.view(batch, -1)
    return preds


# --------------------------------------------------------------------------
# Pure-JAX (XLA) reference for validation (same bf16-operand / f32-accum math)
# --------------------------------------------------------------------------
def _conv3d_ref(x_ncdhw, layer_p, layer_c, neg_slope):
    KD, KH, KW = layer_c["kernel"]
    cin, cout = layer_c["cin"], layer_c["cout"]
    K = KD * KH * KW * cin
    w = layer_p["w"][:K, :cout].astype(jnp.float32)
    w = w.reshape(KD, KH, KW, cin, cout).transpose(4, 3, 0, 1, 2)   # OIDHW
    b = layer_p["b"][0, :cout].astype(jnp.float32)
    x = x_ncdhw.astype(jnp.bfloat16).astype(jnp.float32)    # match kernel operand rounding
    y = lax.conv_general_dilated(
        x, w, window_strides=layer_c["stride"], padding="VALID",
        dimension_numbers=("NCDHW", "OIDHW", "NCDHW"),
        precision=lax.Precision.HIGHEST)
    y = y + b.reshape(1, -1, 1, 1, 1)
    if neg_slope is not None:
        y = jnp.where(y >= 0.0, y, neg_slope * y)
    return y


def temporal_discriminator_forward_ref(params, config, bottom_fmaps, num_warmup_frames,
                                       batch_size, neg_slope):
    x = _build_temporal_input(bottom_fmaps, num_warmup_frames, batch_size)
    preds = []
    for stage_p, stage_c in zip(params, config):
        for lp, lc in zip(stage_p["layers"], stage_c["layers"]):
            x = _conv3d_ref(x, lp, lc, neg_slope)
        p = _conv3d_ref(x, stage_p["logit"], stage_c["logit"], None)
        preds.append(p.reshape(batch_size, -1))
    return preds


# --------------------------------------------------------------------------
if __name__ == "__main__":
    key = jax.random.PRNGKey(0)

    # Small, module-consistent configuration.
    batch_size = 2
    num_filters = 1            # -> in_channels = num_filters * 16 = 16
    img_size = (5, 5)          # not (48, 80) -> kernel1=(2,2,2), kernel2=(3,3,3)
    temporal_window = 6        # < 12 -> single conv stack + single logit
    neg_slope = 0.2
    num_warmup_frames = 3
    num_frame_groups = 8       # temporal depth D = 3 + (8 - (2*3-1)) = 6
    C = num_filters * 16
    H, W = img_size

    k_params, k_data = jax.random.split(key)
    params, config = init_temporal_discriminator_params(
        k_params, num_filters, img_size, temporal_window)
    bottom_fmaps = jax.random.normal(
        k_data, (num_frame_groups * batch_size, C, H, W), jnp.float32)

    fwd = jax.jit(lambda p, f: temporal_discriminator_forward(
        p, config, f, num_warmup_frames, batch_size, neg_slope))
    preds = fwd(params, bottom_fmaps)
    preds = [jax.block_until_ready(p) for p in preds]

    refs = temporal_discriminator_forward_ref(
        params, config, bottom_fmaps, num_warmup_frames, batch_size, neg_slope)
    for p_out, r in zip(preds, refs):
        assert p_out.shape == r.shape, (p_out.shape, r.shape)
        err = float(jnp.max(jnp.abs(p_out - r)))
        assert jnp.allclose(p_out, r, rtol=1e-2, atol=1e-2), ("mismatch", err)

    print("KERNEL_OK")
</pallas_src>

<mosaic_0001>
module attributes {stable_mosaic.version = 11 : i64} {
  func.func @_matmul_bias_act_kernel(%arg0: i32, %arg1: memref<128x128xbf16, #tpu.memory_space<vmem>>, %arg2: memref<128x128xbf16, #tpu.memory_space<vmem>>, %arg3: memref<1x128xf32, #tpu.memory_space<vmem>>, %arg4: memref<128x128xf32, #tpu.memory_space<vmem>>) attributes {dimension_semantics = [#tpu.dimension_semantics<parallel>], iteration_bounds = array<i64: 2>, scalar_prefetch = 0 : i64, scratch_operands = 0 : i64, tpu.core_type = #tpu.core_type<tc>, window_params = [{transform_indices = @transform_0, window_bounds = array<i64: 128, 128>}, {pipeline_mode = #tpu.pipeline_mode<synchronous>, transform_indices = @transform_1, window_bounds = array<i64: 128, 128>}, {pipeline_mode = #tpu.pipeline_mode<synchronous>, transform_indices = @transform_2, window_bounds = array<i64: 1, 128>}, {transform_indices = @transform_3, window_bounds = array<i64: 128, 128>}]} {
    %c0 = arith.constant 0 : index
    %c0_0 = arith.constant 0 : index
    %0 = vector.load %arg1[%c0, %c0_0] : memref<128x128xbf16, #tpu.memory_space<vmem>>, vector<128x128xbf16>
    %c0_1 = arith.constant 0 : index
    %c0_2 = arith.constant 0 : index
    %1 = vector.load %arg2[%c0_1, %c0_2] : memref<128x128xbf16, #tpu.memory_space<vmem>>, vector<128x128xbf16>
    %cst = arith.constant dense<0.000000e+00> : vector<128x128xf32>
    %2 = tpu.matmul %0, %1, %cst {dimension_numbers = #tpu.dot_dimension_numbers<[1], [0], [0], [1], [0, 0, 1, 1], [], []>} : vector<128x128xbf16>, vector<128x128xbf16>, vector<128x128xf32> -> vector<128x128xf32>
    %c0_3 = arith.constant 0 : index
    %c0_4 = arith.constant 0 : index
    %3 = vector.load %arg3[%c0_3, %c0_4] : memref<1x128xf32, #tpu.memory_space<vmem>>, vector<1x128xf32>
    %4 = vector.broadcast %3 : vector<1x128xf32> to vector<128x128xf32>
    %5 = arith.addf %2, %4 : vector<128x128xf32>
    %cst_5 = arith.constant 0.000000e+00 : f32
    %6 = vector.broadcast %cst_5 : f32 to vector<128x128xf32>
    %7 = arith.cmpf oge, %5, %6 : vector<128x128xf32>
    %cst_6 = arith.constant 2.000000e-01 : f32
    %8 = vector.broadcast %cst_6 : f32 to vector<128x128xf32>
    %9 = arith.mulf %8, %5 : vector<128x128xf32>
    %10 = arith.select %7, %5, %9 : vector<128x128xi1>, vector<128x128xf32>
    %c0_7 = arith.constant 0 : index
    %c0_8 = arith.constant 0 : index
    %11 = vector.load %arg4[%c0_7, %c0_8] : memref<128x128xf32, #tpu.memory_space<vmem>>, vector<128x128xf32>
    tpu.vector_store %arg4[%c0_7, %c0_8], %10 {strides = array<i32>} : memref<128x128xf32, #tpu.memory_space<vmem>>, vector<128x128xf32>,
    return
  }
  func.func @transform_0(%arg0: i32) -> (i32, i32) {
    %c0_i32 = arith.constant 0 : i32
    %c0_i32_0 = arith.constant 0 : i32
    return %arg0, %c0_i32 : i32, i32
  }
  func.func @transform_1(%arg0: i32) -> (i32, i32) {
    %c0_i32 = arith.constant 0 : i32
    %c0_i32_0 = arith.constant 0 : i32
    %c0_i32_1 = arith.constant 0 : i32
    return %c0_i32, %c0_i32_0 : i32, i32
  }
  func.func @transform_2(%arg0: i32) -> (i32, i32) {
    %c0_i32 = arith.constant 0 : i32
    %c0_i32_0 = arith.constant 0 : i32
    %c0_i32_1 = arith.constant 0 : i32
    return %c0_i32, %c0_i32_0 : i32, i32
  }
  func.func @transform_3(%arg0: i32) -> (i32, i32) {
    %c0_i32 = arith.constant 0 : i32
    %c0_i32_0 = arith.constant 0 : i32
    return %arg0, %c0_i32 : i32, i32
  }
}

module attributes {stable_mosaic.version = 11 : i64} {
  func.func @_matmul_bias_act_kernel(%arg0: i32, %arg1: memref<128x1792xbf16, #tpu.memory_space<vmem>>, %arg2: memref<1792x128xbf16, #tpu.memory_space<vmem>>, %arg3: memref<1x128xf32, #tpu.memory_space<vmem>>, %arg4: memref<128x128xf32, #tpu.memory_space<vmem>>) attributes {dimension_semantics = [#tpu.dimension_semantics<parallel>], iteration_bounds = array<i64: 1>, scalar_prefetch = 0 : i64, scratch_operands = 0 : i64, tpu.core_type = #tpu.core_type<tc>, window_params = [{transform_indices = @transform_0, window_bounds = array<i64: 128, 1792>}, {pipeline_mode = #tpu.pipeline_mode<synchronous>, transform_indices = @transform_1, window_bounds = array<i64: 1792, 128>}, {pipeline_mode = #tpu.pipeline_mode<synchronous>, transform_indices = @transform_2, window_bounds = array<i64: 1, 128>}, {transform_indices = @transform_3, window_bounds = array<i64: 128, 128>}]} {
    %c0 = arith.constant 0 : index
    %c0_0 = arith.constant 0 : index
    %0 = vector.load %arg1[%c0, %c0_0] : memref<128x1792xbf16, #tpu.memory_space<vmem>>, vector<128x1792xbf16>
    %c0_1 = arith.constant 0 : index
    %c0_2 = arith.constant 0 : index
    %1 = vector.load %arg2[%c0_1, %c0_2] : memref<1792x128xbf16, #tpu.memory_space<vmem>>, vector<1792x128xbf16>
    %cst = arith.constant dense<0.000000e+00> : vector<128x128xf32>
    %2 = tpu.matmul %0, %1, %cst {dimension_numbers = #tpu.dot_dimension_numbers<[1], [0], [0], [1], [0, 0, 1, 1], [], []>} : vector<128x1792xbf16>, vector<1792x128xbf16>, vector<128x128xf32> -> vector<128x128xf32>
    %c0_3 = arith.constant 0 : index
    %c0_4 = arith.constant 0 : index
    %3 = vector.load %arg3[%c0_3, %c0_4] : memref<1x128xf32, #tpu.memory_space<vmem>>, vector<1x128xf32>
    %4 = vector.broadcast %3 : vector<1x128xf32> to vector<128x128xf32>
    %5 = arith.addf %2, %4 : vector<128x128xf32>
    %cst_5 = arith.constant 0.000000e+00 : f32
    %6 = vector.broadcast %cst_5 : f32 to vector<128x128xf32>
    %7 = arith.cmpf oge, %5, %6 : vector<128x128xf32>
    %cst_6 = arith.constant 2.000000e-01 : f32
    %8 = vector.broadcast %cst_6 : f32 to vector<128x128xf32>
    %9 = arith.mulf %8, %5 : vector<128x128xf32>
    %10 = arith.select %7, %5, %9 : vector<128x128xi1>, vector<128x128xf32>
    %c0_7 = arith.constant 0 : index
    %c0_8 = arith.constant 0 : index
    %11 = vector.load %arg4[%c0_7, %c0_8] : memref<128x128xf32, #tpu.memory_space<vmem>>, vector<128x128xf32>
    tpu.vector_store %arg4[%c0_7, %c0_8], %10 {strides = array<i32>} : memref<128x128xf32, #tpu.memory_space<vmem>>, vector<128x128xf32>,
    return
  }
  func.func @transform_0(%arg0: i32) -> (i32, i32) {
    %c0_i32 = arith.constant 0 : i32
    %c0_i32_0 = arith.constant 0 : i32
    return %arg0, %c0_i32 : i32, i32
  }
  func.func @transform_1(%arg0: i32) -> (i32, i32) {
    %c0_i32 = arith.constant 0 : i32
    %c0_i32_0 = arith.constant 0 : i32
    %c0_i32_1 = arith.constant 0 : i32
    return %c0_i32, %c0_i32_0 : i32, i32
  }
  func.func @transform_2(%arg0: i32) -> (i32, i32) {
    %c0_i32 = arith.constant 0 : i32
    %c0_i32_0 = arith.constant 0 : i32
    %c0_i32_1 = arith.constant 0 : i32
    return %c0_i32, %c0_i32_0 : i32, i32
  }
  func.func @transform_3(%arg0: i32) -> (i32, i32) {
    %c0_i32 = arith.constant 0 : i32
    %c0_i32_0 = arith.constant 0 : i32
    return %arg0, %c0_i32 : i32, i32
  }
}

module attributes {stable_mosaic.version = 11 : i64} {
  func.func @_matmul_bias_act_kernel(%arg0: i32, %arg1: memref<128x256xbf16, #tpu.memory_space<vmem>>, %arg2: memref<256x128xbf16, #tpu.memory_space<vmem>>, %arg3: memref<1x128xf32, #tpu.memory_space<vmem>>, %arg4: memref<128x128xf32, #tpu.memory_space<vmem>>) attributes {dimension_semantics = [#tpu.dimension_semantics<parallel>], iteration_bounds = array<i64: 1>, scalar_prefetch = 0 : i64, scratch_operands = 0 : i64, tpu.core_type = #tpu.core_type<tc>, window_params = [{transform_indices = @transform_0, window_bounds = array<i64: 128, 256>}, {pipeline_mode = #tpu.pipeline_mode<synchronous>, transform_indices = @transform_1, window_bounds = array<i64: 256, 128>}, {pipeline_mode = #tpu.pipeline_mode<synchronous>, transform_indices = @transform_2, window_bounds = array<i64: 1, 128>}, {transform_indices = @transform_3, window_bounds = array<i64: 128, 128>}]} {
    %c0 = arith.constant 0 : index
    %c0_0 = arith.constant 0 : index
    %0 = vector.load %arg1[%c0, %c0_0] : memref<128x256xbf16, #tpu.memory_space<vmem>>, vector<128x256xbf16>
    %c0_1 = arith.constant 0 : index
    %c0_2 = arith.constant 0 : index
    %1 = vector.load %arg2[%c0_1, %c0_2] : memref<256x128xbf16, #tpu.memory_space<vmem>>, vector<256x128xbf16>
    %cst = arith.constant dense<0.000000e+00> : vector<128x128xf32>
    %2 = tpu.matmul %0, %1, %cst {dimension_numbers = #tpu.dot_dimension_numbers<[1], [0], [0], [1], [0, 0, 1, 1], [], []>} : vector<128x256xbf16>, vector<256x128xbf16>, vector<128x128xf32> -> vector<128x128xf32>
    %c0_3 = arith.constant 0 : index
    %c0_4 = arith.constant 0 : index
    %3 = vector.load %arg3[%c0_3, %c0_4] : memref<1x128xf32, #tpu.memory_space<vmem>>, vector<1x128xf32>
    %4 = vector.broadcast %3 : vector<1x128xf32> to vector<128x128xf32>
    %5 = arith.addf %2, %4 : vector<128x128xf32>
    %c0_5 = arith.constant 0 : index
    %c0_6 = arith.constant 0 : index
    %6 = vector.load %arg4[%c0_5, %c0_6] : memref<128x128xf32, #tpu.memory_space<vmem>>, vector<128x128xf32>
    tpu.vector_store %arg4[%c0_5, %c0_6], %5 {strides = array<i32>} : memref<128x128xf32, #tpu.memory_space<vmem>>, vector<128x128xf32>,
    return
  }
  func.func @transform_0(%arg0: i32) -> (i32, i32) {
    %c0_i32 = arith.constant 0 : i32
    %c0_i32_0 = arith.constant 0 : i32
    return %arg0, %c0_i32 : i32, i32
  }
  func.func @transform_1(%arg0: i32) -> (i32, i32) {
    %c0_i32 = arith.constant 0 : i32
    %c0_i32_0 = arith.constant 0 : i32
    %c0_i32_1 = arith.constant 0 : i32
    return %c0_i32, %c0_i32_0 : i32, i32
  }
  func.func @transform_2(%arg0: i32) -> (i32, i32) {
    %c0_i32 = arith.constant 0 : i32
    %c0_i32_0 = arith.constant 0 : i32
    %c0_i32_1 = arith.constant 0 : i32
    return %c0_i32, %c0_i32_0 : i32, i32
  }
  func.func @transform_3(%arg0: i32) -> (i32, i32) {
    %c0_i32 = arith.constant 0 : i32
    %c0_i32_0 = arith.constant 0 : i32
    return %arg0, %c0_i32 : i32, i32
  }
}

</mosaic_0001>

<llo_original>
// kernel: _lambda_.3
$region0: #{_lambda_.3}
  #allocation0 [shape = 'u32[]', space=smem, size = 0x4, offset = 0x4, fixed_abs, tag = 'smem constant byte address 0x4 - core index']
  #allocation1 [shape = 'u32[144,128]{1,0:T(1,128)}', space=vmem, size = 0x12000, scoped, tag = 'internal scratch']
  %s0 = inlined_call_operand.vmem [shape: bf16[256,128], index: 0, kind: input, shape index: {}]
  %s1 = inlined_call_operand.vmem [shape: bf16[128,128], index: 1, kind: input, shape index: {}]
  %s2 = inlined_call_operand.vmem [shape: f32[1,128], index: 2, kind: input, shape index: {}]
  %s3 = inlined_call_operand.vmem [shape: f32[256,128], index: 3, kind: output, shape index: {}]
  %s4 = sld [smem:[#allocation0]]
  $region45: #{_lambda_.3} parent=0
    _
  %s6 = ssub.s32 1, %s4
  %s7 = scalar_select 0, %s6, %s4
  loop: start=0, step=1, limit=4
  $region2: #{_lambda_.3} parent=0 // loop_pre_header
    _
  $region3: #{_lambda_.3} parent=0 // loop_header
    %s9 = sphi 0, %s13
    %p10 = scmp.ge.s32.totalorder %s9, 4
    %s19 = sphi 0, %s21
    %s22 = sphi 0, %s19
    %s23 = sphi 0, %s22
    %s39 = sphi 0, %s23
    %s43 = sphi 0, %s43
    %s45 = sphi 0, %s43
    %s46 = sphi 0, %s45
    %s60 = sphi 0, %s46
    %s64 = sphi 0, %s64
    %s66 = sphi 0, %s64
    %s67 = sphi 0, %s66
    %s81 = sphi 0, %s67
    %s87 = sphi 0, %s89
    %s90 = sphi 0, %s87
    %s91 = sphi 0, %s90
    %s107 = sphi 0, %s91
  $region4: #{_lambda_.3} parent=0 // loop_header_branch
    %12 = sbr.rel (%p10) target = $region8
  $region5: #{_lambda_.3} parent=0 // loop_body
    %s14 = ssub.s32 %s9, 1
    %s15 = ssub.s32 %s9, 2
    %s16 = sadd.s32 %s9, 1
    %s17 = ssub.s32 %s9, %s16
    %p18 = scmp.eq.s32.totalorder %s17, 0
    %s20 = sadd.s32 %s19, 1
    %s21 = scalar_select %p18, %s19, %s20
    %p24 = pneg %p18
    %p25 = scmp.eq.s32.totalorder %s9, 1
    %p26 = por %p24, %p25
    %p27 = scmp.ne.s32.totalorder %s19, %s22
    %p28 = scmp.eq.s32.totalorder %s9, 0
    %p29 = por %p27, %p28
    %p30 = scmp.ne.s32.totalorder %s19, %s22
    %p31 = scmp.eq.s32.totalorder %s14, 1
    %p32 = por %p30, %p31
    %p33 = scmp.ne.s32.totalorder %s22, %s23
    %p34 = scmp.eq.s32.totalorder %s14, 0
    %p35 = por %p33, %p34
    %p36 = scmp.ne.s32.totalorder %s22, %s23
    %p37 = scmp.eq.s32.totalorder %s15, 1
    %p38 = por %p36, %p37
    %p40 = scmp.ne.s32.totalorder %s23, %s39
    %p41 = scmp.eq.s32.totalorder %s15, 0
    %p42 = por %p40, %p41
    %s44 = sadd.s32 %s43, 1
    %p47 = scmp.eq.s32.totalorder %s9, 1
    %p48 = scmp.ne.s32.totalorder %s43, %s45
    %p49 = scmp.eq.s32.totalorder %s9, 0
    %p50 = por %p48, %p49
    %p51 = scmp.ne.s32.totalorder %s43, %s45
    %p52 = scmp.eq.s32.totalorder %s14, 1
    %p53 = por %p51, %p52
    %p54 = scmp.ne.s32.totalorder %s45, %s46
    %p55 = scmp.eq.s32.totalorder %s14, 0
    %p56 = por %p54, %p55
    %p57 = scmp.ne.s32.totalorder %s45, %s46
    %p58 = scmp.eq.s32.totalorder %s15, 1
    %p59 = por %p57, %p58
    %p61 = scmp.ne.s32.totalorder %s46, %s60
    %p62 = scmp.eq.s32.totalorder %s15, 0
    %p63 = por %p61, %p62
    %s65 = sadd.s32 %s64, 1
    %p68 = scmp.eq.s32.totalorder %s9, 1
    %p69 = scmp.ne.s32.totalorder %s64, %s66
    %p70 = scmp.eq.s32.totalorder %s9, 0
    %p71 = por %p69, %p70
    %p72 = scmp.ne.s32.totalorder %s64, %s66
    %p73 = scmp.eq.s32.totalorder %s14, 1
    %p74 = por %p72, %p73
    %p75 = scmp.ne.s32.totalorder %s66, %s67
    %p76 = scmp.eq.s32.totalorder %s14, 0
    %p77 = por %p75, %p76
    %p78 = scmp.ne.s32.totalorder %s66, %s67
    %p79 = scmp.eq.s32.totalorder %s15, 1
    %p80 = por %p78, %p79
    %p82 = scmp.ne.s32.totalorder %s67, %s81
    %p83 = scmp.eq.s32.totalorder %s15, 0
    %p84 = por %p82, %p83
    %s85 = ssub.s32 %s9, %s16
    %p86 = scmp.eq.s32.totalorder %s85, 0
    %s88 = sadd.s32 %s87, 1
    %s89 = scalar_select %p86, %s87, %s88
    %p92 = pneg %p86
    %p93 = scmp.eq.s32.totalorder %s9, 1
    %p94 = por %p92, %p93
    %p95 = scmp.ne.s32.totalorder %s87, %s90
    %p96 = scmp.eq.s32.totalorder %s9, 0
    %p97 = por %p95, %p96
    %p98 = scmp.ne.s32.totalorder %s87, %s90
    %p99 = scmp.eq.s32.totalorder %s14, 1
    %p100 = por %p98, %p99
    %p101 = scmp.ne.s32.totalorder %s90, %s91
    %p102 = scmp.eq.s32.totalorder %s14, 0
    %p103 = por %p101, %p102
    %p104 = scmp.ne.s32.totalorder %s90, %s91
    %p105 = scmp.eq.s32.totalorder %s15, 1
    %p106 = por %p104, %p105
    %p108 = scmp.ne.s32.totalorder %s91, %s107
    %p109 = scmp.eq.s32.totalorder %s15, 0
    %p110 = por %p108, %p109
    %p111 = scmp.le.s32.totalorder 1, %s9
    %p112 = scmp.lt.s32.totalorder %s9, 3
    %p113 = pnand %p111, %p112
    %p114 = pneg %p113
    // Predicated region
    $region9: #{_lambda_.3} parent=5 // pred_check
      _
    $region10: #{_lambda_.3} parent=5 // pred_check_branch
      %116 = sbr.rel (%p113) target = $region12
    $region11: #{_lambda_.3} parent=5 // pred_region
      %s117 = ssub.s32 %s9, 1
      // Predicated region
      $region13: #{_lambda_.3} parent=11 // pred_check
        %p118 = pneg %p56
      $region14: #{_lambda_.3} parent=11 // pred_check_branch
        %120 = sbr.rel (%p118) target = $region16
      $region15: #{_lambda_.3} parent=11 // pred_region
        _
      $region16: #{_lambda_.3} parent=11 // pred_fallthru
        _
      // Predicated region
      $region17: #{_lambda_.3} parent=11 // pred_check
        %p121 = pneg %p77
      $region18: #{_lambda_.3} parent=11 // pred_check_branch
        %123 = sbr.rel (%p121) target = $region20
      $region19: #{_lambda_.3} parent=11 // pred_region
        _
      $region20: #{_lambda_.3} parent=11 // pred_fallthru
        _
    $region12: #{_lambda_.3} parent=5 // pred_fallthru
      _
    %p124 = scmp.lt.s32.totalorder %s9, 2
    // Predicated region
    $region21: #{_lambda_.3} parent=5 // pred_check
      %p125 = pneg %p124
    $region22: #{_lambda_.3} parent=5 // pred_check_branch
      %127 = sbr.rel (%p125) target = $region24
    $region23: #{_lambda_.3} parent=5 // pred_region
      // Predicated region
      $region25: #{_lambda_.3} parent=23 // pred_check
        %p128 = pneg %p29
      $region26: #{_lambda_.3} parent=23 // pred_check_branch
        %130 = sbr.rel (%p128) target = $region28
      $region27: #{_lambda_.3} parent=23 // pred_region
        %s131 = smul.u32 16, %s9
        %p132 = scmp.lt.s32.totalorder %s131, 31
        %s133 = scalar_select %p132, %s131, 31
        %s134 = smul.addr %s133, 4
        %s135 = scalar_lea.vmem %s0, %s134
        %s136 = smul.u32 16, %s9
      $region28: #{_lambda_.3} parent=23 // pred_fallthru
        _
    $region24: #{_lambda_.3} parent=5 // pred_fallthru
      _
    %p137 = scmp.le.s32.totalorder 1, %s9
    %p138 = scmp.lt.s32.totalorder %s9, 3
    %p139 = pnand %p137, %p138
    %p140 = pneg %p139
    // Predicated region
    $region29: #{_lambda_.3} parent=5 // pred_check
      _
    $region30: #{_lambda_.3} parent=5 // pred_check_branch
      %142 = sbr.rel (%p139) target = $region32
    $region31: #{_lambda_.3} parent=5 // pred_region
      %s143 = ssub.s32 %s9, 1
      %s144 = smul.u32 16, %s14
      %p145 = scmp.lt.s32.totalorder %s144, 31
      %s146 = scalar_select %p145, %s144, 31
      %s147 = smul.addr %s146, 4
      %s148 = scalar_lea.vmem %s0, %s147
      %p149 = pneg %p35
      %p150 = pneg %p32
      %p151 = pneg %p56
      %p152 = pneg %p53
      %p153 = pneg %p77
      %p154 = pneg %p74
      %p155 = pneg %p103
      %p156 = pneg %p100
      %s157 = smul.u32 16, %s14
      %p158 = scmp.lt.s32.totalorder %s157, 31
      %s159 = scalar_select %p158, %s157, 31
      %s160 = smul.addr %s159, 8
      %s161 = scalar_lea.vmem %s3, %s160
      %s162 = smul.u32 16, %s14
      %p163 = scmp.lt.s32.totalorder %s162, 31
      %s164 = scalar_select %p163, %s162, 31
      %s165 = smul.addr %s164, 4
      %s166 = scalar_lea.vmem %s0, %s165
      %s167 = smul.u32 16, %s14
      %s168 = smul.u32 16, %s14
      %p169 = scmp.lt.s32.totalorder %s168, 31
      %s170 = scalar_select %p169, %s168, 31
      %s171 = smul.addr %s170, 8
      %s172 = scalar_lea.vmem %s3, %s171
      %s173 = smul.u32 16, %s14
      %v175 = vld [vmem:[%s166] sm:$0xf]
      %v176 = vld [vmem:[%s166 + $0x4] sm:$0xf]
      %v177 = vld [vmem:[%s166 + $0x8] sm:$0xf]
      %v178 = vld [vmem:[%s166 + $0xc] sm:$0xf]
      %v179 = vld [vmem:[%s166 + $0x10] sm:$0xf]
      %v180 = vld [vmem:[%s166 + $0x14] sm:$0xf]
      %v181 = vld [vmem:[%s166 + $0x18] sm:$0xf]
      %v182 = vld [vmem:[%s166 + $0x1c] sm:$0xf]
      %v183 = vld [vmem:[%s166 + $0x20] sm:$0xf]
      %v184 = vld [vmem:[%s166 + $0x24] sm:$0xf]
      %v185 = vld [vmem:[%s166 + $0x28] sm:$0xf]
      %v186 = vld [vmem:[%s166 + $0x2c] sm:$0xf]
      %v187 = vld [vmem:[%s166 + $0x30] sm:$0xf]
      %v188 = vld [vmem:[%s166 + $0x34] sm:$0xf]
      %v189 = vld [vmem:[%s166 + $0x38] sm:$0xf]
      %v190 = vld [vmem:[%s166 + $0x3c] sm:$0xf]
      %v191 = vld [vmem:[%s1] sm:$0xf]
      %v192 = vld [vmem:[%s1 + $0x4] sm:$0xf]
      %v193 = vld [vmem:[%s1 + $0x8] sm:$0xf]
      %v194 = vld [vmem:[%s1 + $0xc] sm:$0xf]
      %v195 = vld [vmem:[%s1 + $0x10] sm:$0xf]
      %v196 = vld [vmem:[%s1 + $0x14] sm:$0xf]
      %v197 = vld [vmem:[%s1 + $0x18] sm:$0xf]
      %v198 = vld [vmem:[%s1 + $0x1c] sm:$0xf]
      %v199 = vld [vmem:[%s1 + $0x20] sm:$0xf]
      %v200 = vld [vmem:[%s1 + $0x24] sm:$0xf]
      %v201 = vld [vmem:[%s1 + $0x28] sm:$0xf]
      %v202 = vld [vmem:[%s1 + $0x2c] sm:$0xf]
      %v203 = vld [vmem:[%s1 + $0x30] sm:$0xf]
      %v204 = vld [vmem:[%s1 + $0x34] sm:$0xf]
      %v205 = vld [vmem:[%s1 + $0x38] sm:$0xf]
      %v206 = vld [vmem:[%s1 + $0x3c] sm:$0xf]
      %v207 = vld [vmem:[%s2] sm:$0x1]
      %v209 = vlaneseq
      %v210 = vshrl.u32 %v209, 7
      %v211 = vsub.s32 0, %v210
      %v212 = vrot.slane %v207, %v211
      %v230 = vunpack.c.l.b16 %v175
      %v231 = vunpack.c.l.b16 %v176
      %v232 = vunpack.c.l.b16 %v177
      %v233 = vunpack.c.l.b16 %v178
      %v234 = vunpack.c.l.b16 %v179
      %v235 = vunpack.c.l.b16 %v180
      %v236 = vunpack.c.l.b16 %v181
      %v237 = vunpack.c.l.b16 %v182
      %v238 = vunpack.c.l.b16 %v183
      %v239 = vunpack.c.l.b16 %v184
      %v240 = vunpack.c.l.b16 %v185
      %v241 = vunpack.c.l.b16 %v186
      %v242 = vunpack.c.l.b16 %v187
      %v243 = vunpack.c.l.b16 %v188
      %v244 = vunpack.c.l.b16 %v189
      %v245 = vunpack.c.l.b16 %v190
      %v246 = vpack.c.b16 %v231, %v230
      %v247 = vpack.c.b16 %v233, %v232
      %v248 = vpack.c.b16 %v235, %v234
      %v249 = vpack.c.b16 %v237, %v236
      %v250 = vpack.c.b16 %v239, %v238
      %v251 = vpack.c.b16 %v241, %v240
      %v252 = vpack.c.b16 %v243, %v242
      %v253 = vpack.c.b16 %v245, %v244
      %v278 = vunpack.c.l.b16 %v191
      %v279 = vunpack.c.l.b16 %v192
      %v280 = vunpack.c.l.b16 %v193
      %v281 = vunpack.c.l.b16 %v194
      %v282 = vunpack.c.l.b16 %v195
      %v283 = vunpack.c.l.b16 %v196
      %v284 = vunpack.c.l.b16 %v197
      %v285 = vunpack.c.l.b16 %v198
      %v286 = vunpack.c.l.b16 %v199
      %v287 = vunpack.c.l.b16 %v200
      %v288 = vunpack.c.l.b16 %v201
      %v289 = vunpack.c.l.b16 %v202
      %v290 = vunpack.c.l.b16 %v203
      %v291 = vunpack.c.l.b16 %v204
      %v292 = vunpack.c.l.b16 %v205
      %v293 = vunpack.c.l.b16 %v206
      %v294 = vpack.c.b16 %v279, %v278
      %v295 = vpack.c.b16 %v281, %v280
      %v296 = vpack.c.b16 %v283, %v282
      %v297 = vpack.c.b16 %v285, %v284
      %v298 = vpack.c.b16 %v287, %v286
      %v299 = vpack.c.b16 %v289, %v288
      %v300 = vpack.c.b16 %v291, %v290
      %v301 = vpack.c.b16 %v293, %v292
      %310 = vmatprep.subr.bf16.mxu0 0
      %311 = vmatpush1.bf16.msra.mxu0 %v294
      %312 = vmatprep.subr.bf16.mxu0 0
      %313 = vmatpush1.bf16.msra.mxu0 %v295
      %314 = vmatprep.subr.bf16.mxu0 0
      %315 = vmatpush1.bf16.msra.mxu0 %v296
      %316 = vmatprep.subr.bf16.mxu0 0
      %317 = vmatpush1.bf16.msra.mxu0 %v297
      %318 = vmatprep.subr.bf16.mxu0 0
      %319 = vmatpush1.bf16.msra.mxu0 %v298
      %320 = vmatprep.subr.bf16.mxu0 0
      %321 = vmatpush1.bf16.msra.mxu0 %v299
      %322 = vmatprep.subr.bf16.mxu0 0
      %323 = vmatpush1.bf16.msra.mxu0 %v300
      %324 = vmatprep.subr.bf16.mxu0 0
      %325 = vmatpush1.bf16.msra.mxu0 %v301
      %326 = vmatprep.subr.bf16.mxu0 0
      %327 = vmatpush1.bf16.msra.mxu0 0
      %328 = vmatprep.subr.bf16.mxu0 0
      %329 = vmatpush1.bf16.msra.mxu0 0
      %330 = vmatprep.subr.bf16.mxu0 0
      %331 = vmatpush1.bf16.msra.mxu0 0
      %332 = vmatprep.subr.bf16.mxu0 0
      %333 = vmatpush1.bf16.msra.mxu0 0
      %334 = vmatprep.subr.bf16.mxu0 0
      %335 = vmatpush1.bf16.msra.mxu0 0
      %336 = vmatprep.subr.bf16.mxu0 0
      %337 = vmatpush1.bf16.msra.mxu0 0
      %338 = vmatprep.subr.bf16.mxu0 0
      %339 = vmatpush1.bf16.msra.mxu0 0
      %340 = vmatprep.subr.bf16.mxu0 0
      %341 = vmatpush1.bf16.msra.mxu0 0
      %342 = vmatprep.mubr.bf16.mxu0 0
      %343 = vmatmul.mubr.bf16.gmra.mrb[0].mxu0 %v246
      %v344 = vpop.f32.mrb[0].mxu0
      %v345 = vadd.f32 %v212, %v344
      %v346 = vpop.f32.mrb[0].mxu0
      %v347 = vpop.f32.mrb[0].mxu0
      %v348 = vadd.f32 %v212, %v347
      %v349 = vpop.f32.mrb[0].mxu0
      %350 = vmatprep.mubr.bf16.mxu0 0
      %351 = vmatmul.mubr.bf16.gmra.mrb[0].mxu0 %v247
      %v352 = vpop.f32.mrb[0].mxu0
      %v353 = vadd.f32 %v212, %v352
      %v354 = vpop.f32.mrb[0].mxu0
      %v355 = vpop.f32.mrb[0].mxu0
      %v356 = vadd.f32 %v212, %v355
      %v357 = vpop.f32.mrb[0].mxu0
      %358 = vmatprep.mubr.bf16.mxu0 0
      %359 = vmatmul.mubr.bf16.gmra.mrb[0].mxu0 %v248
      %v360 = vpop.f32.mrb[0].mxu0
      %v361 = vadd.f32 %v212, %v360
      %v362 = vpop.f32.mrb[0].mxu0
      %v363 = vpop.f32.mrb[0].mxu0
      %v364 = vadd.f32 %v212, %v363
      %v365 = vpop.f32.mrb[0].mxu0
      %366 = vmatprep.mubr.bf16.mxu0 0
      %367 = vmatmul.mubr.bf16.gmra.mrb[0].mxu0 %v249
      %v368 = vpop.f32.mrb[0].mxu0
      %v369 = vadd.f32 %v212, %v368
      %v370 = vpop.f32.mrb[0].mxu0
      %v371 = vpop.f32.mrb[0].mxu0
      %v372 = vadd.f32 %v212, %v371
      %v373 = vpop.f32.mrb[0].mxu0
      %374 = vmatprep.mubr.bf16.mxu0 0
      %375 = vmatmul.mubr.bf16.gmra.mrb[0].mxu0 %v250
      %v376 = vpop.f32.mrb[0].mxu0
      %v377 = vadd.f32 %v212, %v376
      %v378 = vpop.f32.mrb[0].mxu0
      %v379 = vpop.f32.mrb[0].mxu0
      %v380 = vadd.f32 %v212, %v379
      %v381 = vpop.f32.mrb[0].mxu0
      %382 = vmatprep.mubr.bf16.mxu0 0
      %383 = vmatmul.mubr.bf16.gmra.mrb[0].mxu0 %v251
      %v384 = vpop.f32.mrb[0].mxu0
      %v385 = vadd.f32 %v212, %v384
      %v386 = vpop.f32.mrb[0].mxu0
      %v387 = vpop.f32.mrb[0].mxu0
      %v388 = vadd.f32 %v212, %v387
      %v389 = vpop.f32.mrb[0].mxu0
      %390 = vmatprep.mubr.bf16.mxu0 0
      %391 = vmatmul.mubr.bf16.gmra.mrb[0].mxu0 %v252
      %v392 = vpop.f32.mrb[0].mxu0
      %v393 = vadd.f32 %v212, %v392
      %v394 = vpop.f32.mrb[0].mxu0
      %v395 = vpop.f32.mrb[0].mxu0
      %v396 = vadd.f32 %v212, %v395
      %v397 = vpop.f32.mrb[0].mxu0
      %398 = vmatprep.mubr.bf16.mxu0 0
      %399 = vmatmul.mubr.bf16.gmra.mrb[0].mxu0 %v253
      %v400 = vpop.f32.mrb[0].mxu0
      %v401 = vadd.f32 %v212, %v400
      %v402 = vpop.f32.mrb[0].mxu0
      %v403 = vpop.f32.mrb[0].mxu0
      %v404 = vadd.f32 %v212, %v403
      %v405 = vpop.f32.mrb[0].mxu0
      %406 = vdwg.mxu0
      %vm407 = vcmp.ge.f32.partialorder %v345, 0.0
      %vm408 = vcmp.ge.f32.partialorder %v348, 0.0
      %vm409 = vcmp.ge.f32.partialorder %v353, 0.0
      %vm410 = vcmp.ge.f32.partialorder %v356, 0.0
      %vm411 = vcmp.ge.f32.partialorder %v361, 0.0
      %vm412 = vcmp.ge.f32.partialorder %v364, 0.0
      %vm413 = vcmp.ge.f32.partialorder %v369, 0.0
      %vm414 = vcmp.ge.f32.partialorder %v372, 0.0
      %vm415 = vcmp.ge.f32.partialorder %v377, 0.0
      %vm416 = vcmp.ge.f32.partialorder %v380, 0.0
      %vm417 = vcmp.ge.f32.partialorder %v385, 0.0
      %vm418 = vcmp.ge.f32.partialorder %v388, 0.0
      %vm419 = vcmp.ge.f32.partialorder %v393, 0.0
      %vm420 = vcmp.ge.f32.partialorder %v396, 0.0
      %vm421 = vcmp.ge.f32.partialorder %v401, 0.0
      %vm422 = vcmp.ge.f32.partialorder %v404, 0.0
      %v423 = vmul.f32 %v345, 0.2
      %v424 = vmul.f32 %v348, 0.2
      %v425 = vmul.f32 %v353, 0.2
      %v426 = vmul.f32 %v356, 0.2
      %v427 = vmul.f32 %v361, 0.2
      %v428 = vmul.f32 %v364, 0.2
      %v429 = vmul.f32 %v369, 0.2
      %v430 = vmul.f32 %v372, 0.2
      %v431 = vmul.f32 %v377, 0.2
      %v432 = vmul.f32 %v380, 0.2
      %v433 = vmul.f32 %v385, 0.2
      %v434 = vmul.f32 %v388, 0.2
      %v435 = vmul.f32 %v393, 0.2
      %v436 = vmul.f32 %v396, 0.2
      %v437 = vmul.f32 %v401, 0.2
      %v438 = vmul.f32 %v404, 0.2
      %v439 = vsel %vm407, %v345, %v423
      %v440 = vsel %vm408, %v348, %v424
      %v441 = vsel %vm409, %v353, %v425
      %v442 = vsel %vm410, %v356, %v426
      %v443 = vsel %vm411, %v361, %v427
      %v444 = vsel %vm412, %v364, %v428
      %v445 = vsel %vm413, %v369, %v429
      %v446 = vsel %vm414, %v372, %v430
      %v447 = vsel %vm415, %v377, %v431
      %v448 = vsel %vm416, %v380, %v432
      %v449 = vsel %vm417, %v385, %v433
      %v450 = vsel %vm418, %v388, %v434
      %v451 = vsel %vm419, %v393, %v435
      %v452 = vsel %vm420, %v396, %v436
      %v453 = vsel %vm421, %v401, %v437
      %v454 = vsel %vm422, %v404, %v438
      %455 = vst [vmem:[%s172] sm:$0xff] %v439
      %456 = vst [vmem:[%s172 + $0x8] sm:$0xff] %v440
      %457 = vst [vmem:[%s172 + $0x10] sm:$0xff] %v441
      %458 = vst [vmem:[%s172 + $0x18] sm:$0xff] %v442
      %459 = vst [vmem:[%s172 + $0x20] sm:$0xff] %v443
      %460 = vst [vmem:[%s172 + $0x28] sm:$0xff] %v444
      %461 = vst [vmem:[%s172 + $0x30] sm:$0xff] %v445
      %462 = vst [vmem:[%s172 + $0x38] sm:$0xff] %v446
      %463 = vst [vmem:[%s172 + $0x40] sm:$0xff] %v447
      %464 = vst [vmem:[%s172 + $0x48] sm:$0xff] %v448
      %465 = vst [vmem:[%s172 + $0x50] sm:$0xff] %v449
      %466 = vst [vmem:[%s172 + $0x58] sm:$0xff] %v450
      %467 = vst [vmem:[%s172 + $0x60] sm:$0xff] %v451
      %468 = vst [vmem:[%s172 + $0x68] sm:$0xff] %v452
      %469 = vst [vmem:[%s172 + $0x70] sm:$0xff] %v453
      %470 = vst [vmem:[%s172 + $0x78] sm:$0xff] %v454
      %s471 = smul.u32 16, %s14
      %p472 = scmp.lt.s32.totalorder %s471, 31
      %s473 = scalar_select %p472, %s471, 31
      %s474 = smul.addr %s473, 8
      %s475 = scalar_lea.vmem %s3, %s474
      // Predicated region
      $region33: #{_lambda_.3} parent=31 // pred_check
        %p476 = pneg %p100
      $region34: #{_lambda_.3} parent=31 // pred_check_branch
        %478 = sbr.rel (%p476) target = $region36
      $region35: #{_lambda_.3} parent=31 // pred_region
        %s479 = smul.u32 16, %s14
      $region36: #{_lambda_.3} parent=31 // pred_fallthru
        _
    $region32: #{_lambda_.3} parent=5 // pred_fallthru
      _
    %p480 = scmp.le.s32.totalorder 2, %s9
    // Predicated region
    $region37: #{_lambda_.3} parent=5 // pred_check
      %p481 = pneg %p480
    $region38: #{_lambda_.3} parent=5 // pred_check_branch
      %483 = sbr.rel (%p481) target = $region40
    $region39: #{_lambda_.3} parent=5 // pred_region
      %s484 = ssub.s32 %s9, 2
      // Predicated region
      $region41: #{_lambda_.3} parent=39 // pred_check
        %p485 = pneg %p106
      $region42: #{_lambda_.3} parent=39 // pred_check_branch
        %487 = sbr.rel (%p485) target = $region44
      $region43: #{_lambda_.3} parent=39 // pred_region
        %s488 = smul.u32 16, %s15
        %p489 = scmp.lt.s32.totalorder %s488, 31
        %s490 = scalar_select %p489, %s488, 31
        %s491 = smul.addr %s490, 8
        %s492 = scalar_lea.vmem %s3, %s491
      $region44: #{_lambda_.3} parent=39 // pred_fallthru
        _
    $region40: #{_lambda_.3} parent=5 // pred_fallthru
      _
  $region6: #{_lambda_.3} parent=0 // loop_footer
    %s13 = sadd.s32 1, %s9
  $region7: #{_lambda_.3} parent=0 // loop_footer_branch
    %8 = sbr.rel target = $region3
  $region8: #{_lambda_.3} parent=0 // loop_exit
    _

// kernel: _lambda_.5
$region0: #{_lambda_.5}
  #allocation0 [shape = 'u32[]', space=smem, size = 0x4, offset = 0x4, fixed_abs, tag = 'smem constant byte address 0x4 - core index']
  #allocation1 [shape = 'u32[144,128]{1,0:T(1,128)}', space=vmem, size = 0x12000, scoped, tag = 'internal scratch']
  %s0 = inlined_call_operand.vmem [shape: bf16[128,256], index: 0, kind: input, shape index: {}]
  %s1 = inlined_call_operand.vmem [shape: bf16[256,128], index: 1, kind: input, shape index: {}]
  %s2 = inlined_call_operand.vmem [shape: f32[1,128], index: 2, kind: input, shape index: {}]
  %s3 = inlined_call_operand.vmem [shape: f32[128,128], index: 3, kind: output, shape index: {}]
  %s4 = sld [smem:[#allocation0]]
  $region22: #{_lambda_.5} parent=0
    _
  %s6 = ssub.s32 1, %s4
  %s7 = scalar_select 0, %s6, %s4
  // Predicated region
  $region2: #{_lambda_.5} parent=0 // pred_check
    _
  $region3: #{_lambda_.5} parent=0 // pred_check_branch
    %9 = sbr.rel (0) target = $region5
  $region4: #{_lambda_.5} parent=0 // pred_region
    _
  $region5: #{_lambda_.5} parent=0 // pred_fallthru
    _
  // Predicated region
  $region6: #{_lambda_.5} parent=0 // pred_check
    _
  $region7: #{_lambda_.5} parent=0 // pred_check_branch
    %11 = sbr.rel (0) target = $region9
  $region8: #{_lambda_.5} parent=0 // pred_region
    _
  $region9: #{_lambda_.5} parent=0 // pred_fallthru
    _
  // Predicated region
  $region10: #{_lambda_.5} parent=0 // pred_check
    _
  $region11: #{_lambda_.5} parent=0 // pred_check_branch
    %13 = sbr.rel (0) target = $region13
  $region12: #{_lambda_.5} parent=0 // pred_region
    _
  $region13: #{_lambda_.5} parent=0 // pred_fallthru
    _
  %v15 = vld [vmem:[%s0] sm:$0xff]
  %v16 = vld [vmem:[%s0 + $0x8] sm:$0xff]
  %v17 = vld [vmem:[%s0 + $0x10] sm:$0xff]
  %v18 = vld [vmem:[%s0 + $0x18] sm:$0xff]
  %v19 = vld [vmem:[%s0 + $0x20] sm:$0xff]
  %v20 = vld [vmem:[%s0 + $0x28] sm:$0xff]
  %v21 = vld [vmem:[%s0 + $0x30] sm:$0xff]
  %v22 = vld [vmem:[%s0 + $0x38] sm:$0xff]
  %v23 = vld [vmem:[%s0 + $0x40] sm:$0xff]
  %v24 = vld [vmem:[%s0 + $0x48] sm:$0xff]
  %v25 = vld [vmem:[%s0 + $0x50] sm:$0xff]
  %v26 = vld [vmem:[%s0 + $0x58] sm:$0xff]
  %v27 = vld [vmem:[%s0 + $0x60] sm:$0xff]
  %v28 = vld [vmem:[%s0 + $0x68] sm:$0xff]
  %v29 = vld [vmem:[%s0 + $0x70] sm:$0xff]
  %v30 = vld [vmem:[%s0 + $0x78] sm:$0xff]
  %v31 = vld [vmem:[%s1] sm:$0xf]
  %v32 = vld [vmem:[%s1 + $0x4] sm:$0xf]
  %v33 = vld [vmem:[%s1 + $0x8] sm:$0xf]
  %v34 = vld [vmem:[%s1 + $0xc] sm:$0xf]
  %v35 = vld [vmem:[%s1 + $0x10] sm:$0xf]
  %v36 = vld [vmem:[%s1 + $0x14] sm:$0xf]
  %v37 = vld [vmem:[%s1 + $0x18] sm:$0xf]
  %v38 = vld [vmem:[%s1 + $0x1c] sm:$0xf]
  %v39 = vld [vmem:[%s1 + $0x20] sm:$0xf]
  %v40 = vld [vmem:[%s1 + $0x24] sm:$0xf]
  %v41 = vld [vmem:[%s1 + $0x28] sm:$0xf]
  %v42 = vld [vmem:[%s1 + $0x2c] sm:$0xf]
  %v43 = vld [vmem:[%s1 + $0x30] sm:$0xf]
  %v44 = vld [vmem:[%s1 + $0x34] sm:$0xf]
  %v45 = vld [vmem:[%s1 + $0x38] sm:$0xf]
  %v46 = vld [vmem:[%s1 + $0x3c] sm:$0xf]
  %v47 = vld [vmem:[%s1 + $0x40] sm:$0xf]
  %v48 = vld [vmem:[%s1 + $0x44] sm:$0xf]
  %v49 = vld [vmem:[%s1 + $0x48] sm:$0xf]
  %v50 = vld [vmem:[%s1 + $0x4c] sm:$0xf]
  %v51 = vld [vmem:[%s1 + $0x50] sm:$0xf]
  %v52 = vld [vmem:[%s1 + $0x54] sm:$0xf]
  %v53 = vld [vmem:[%s1 + $0x58] sm:$0xf]
  %v54 = vld [vmem:[%s1 + $0x5c] sm:$0xf]
  %v55 = vld [vmem:[%s1 + $0x60] sm:$0xf]
  %v56 = vld [vmem:[%s1 + $0x64] sm:$0xf]
  %v57 = vld [vmem:[%s1 + $0x68] sm:$0xf]
  %v58 = vld [vmem:[%s1 + $0x6c] sm:$0xf]
  %v59 = vld [vmem:[%s1 + $0x70] sm:$0xf]
  %v60 = vld [vmem:[%s1 + $0x74] sm:$0xf]
  %v61 = vld [vmem:[%s1 + $0x78] sm:$0xf]
  %v62 = vld [vmem:[%s1 + $0x7c] sm:$0xf]
  %v63 = vld [vmem:[%s2] sm:$0x1]
  %v65 = vlaneseq
  %v66 = vshrl.u32 %v65, 7
  %v67 = vsub.s32 0, %v66
  %v68 = vrot.slane %v63, %v67
  %v86 = vunpack.c.l.b16 %v15
  %v87 = vunpack.c.h.b16 %v15
  %v88 = vunpack.c.l.b16 %v16
  %v89 = vunpack.c.h.b16 %v16
  %v90 = vunpack.c.l.b16 %v17
  %v91 = vunpack.c.h.b16 %v17
  %v92 = vunpack.c.l.b16 %v18
  %v93 = vunpack.c.h.b16 %v18
  %v94 = vunpack.c.l.b16 %v19
  %v95 = vunpack.c.h.b16 %v19
  %v96 = vunpack.c.l.b16 %v20
  %v97 = vunpack.c.h.b16 %v20
  %v98 = vunpack.c.l.b16 %v21
  %v99 = vunpack.c.h.b16 %v21
  %v100 = vunpack.c.l.b16 %v22
  %v101 = vunpack.c.h.b16 %v22
  %v102 = vunpack.c.l.b16 %v23
  %v103 = vunpack.c.h.b16 %v23
  %v104 = vunpack.c.l.b16 %v24
  %v105 = vunpack.c.h.b16 %v24
  %v106 = vunpack.c.l.b16 %v25
  %v107 = vunpack.c.h.b16 %v25
  %v108 = vunpack.c.l.b16 %v26
  %v109 = vunpack.c.h.b16 %v26
  %v110 = vunpack.c.l.b16 %v27
  %v111 = vunpack.c.h.b16 %v27
  %v112 = vunpack.c.l.b16 %v28
  %v113 = vunpack.c.h.b16 %v28
  %v114 = vunpack.c.l.b16 %v29
  %v115 = vunpack.c.h.b16 %v29
  %v116 = vunpack.c.l.b16 %v30
  %v117 = vunpack.c.h.b16 %v30
  %v118 = vpack.c.b16 %v88, %v86
  %v119 = vpack.c.b16 %v89, %v87
  %v120 = vpack.c.b16 %v92, %v90
  %v121 = vpack.c.b16 %v93, %v91
  %v122 = vpack.c.b16 %v96, %v94
  %v123 = vpack.c.b16 %v97, %v95
  %v124 = vpack.c.b16 %v100, %v98
  %v125 = vpack.c.b16 %v101, %v99
  %v126 = vpack.c.b16 %v104, %v102
  %v127 = vpack.c.b16 %v105, %v103
  %v128 = vpack.c.b16 %v108, %v106
  %v129 = vpack.c.b16 %v109, %v107
  %v130 = vpack.c.b16 %v112, %v110
  %v131 = vpack.c.b16 %v113, %v111
  %v132 = vpack.c.b16 %v116, %v114
  %v133 = vpack.c.b16 %v117, %v115
  %v182 = vunpack.c.l.b16 %v31
  %v183 = vunpack.c.l.b16 %v32
  %v184 = vunpack.c.l.b16 %v33
  %v185 = vunpack.c.l.b16 %v34
  %v186 = vunpack.c.l.b16 %v35
  %v187 = vunpack.c.l.b16 %v36
  %v188 = vunpack.c.l.b16 %v37
  %v189 = vunpack.c.l.b16 %v38
  %v190 = vunpack.c.l.b16 %v39
  %v191 = vunpack.c.l.b16 %v40
  %v192 = vunpack.c.l.b16 %v41
  %v193 = vunpack.c.l.b16 %v42
  %v194 = vunpack.c.l.b16 %v43
  %v195 = vunpack.c.l.b16 %v44
  %v196 = vunpack.c.l.b16 %v45
  %v197 = vunpack.c.l.b16 %v46
  %v198 = vunpack.c.l.b16 %v47
  %v199 = vunpack.c.l.b16 %v48
  %v200 = vunpack.c.l.b16 %v49
  %v201 = vunpack.c.l.b16 %v50
  %v202 = vunpack.c.l.b16 %v51
  %v203 = vunpack.c.l.b16 %v52
  %v204 = vunpack.c.l.b16 %v53
  %v205 = vunpack.c.l.b16 %v54
  %v206 = vunpack.c.l.b16 %v55
  %v207 = vunpack.c.l.b16 %v56
  %v208 = vunpack.c.l.b16 %v57
  %v209 = vunpack.c.l.b16 %v58
  %v210 = vunpack.c.l.b16 %v59
  %v211 = vunpack.c.l.b16 %v60
  %v212 = vunpack.c.l.b16 %v61
  %v213 = vunpack.c.l.b16 %v62
  %v214 = vpack.c.b16 %v183, %v182
  %v215 = vpack.c.b16 %v185, %v184
  %v216 = vpack.c.b16 %v187, %v186
  %v217 = vpack.c.b16 %v189, %v188
  %v218 = vpack.c.b16 %v191, %v190
  %v219 = vpack.c.b16 %v193, %v192
  %v220 = vpack.c.b16 %v195, %v194
  %v221 = vpack.c.b16 %v197, %v196
  %v222 = vpack.c.b16 %v199, %v198
  %v223 = vpack.c.b16 %v201, %v200
  %v224 = vpack.c.b16 %v203, %v202
  %v225 = vpack.c.b16 %v205, %v204
  %v226 = vpack.c.b16 %v207, %v206
  %v227 = vpack.c.b16 %v209, %v208
  %v228 = vpack.c.b16 %v211, %v210
  %v229 = vpack.c.b16 %v213, %v212
  %246 = vmatprep.subr.bf16.mxu0 0
  %247 = vmatpush1.bf16.msra.mxu0 %v214
  %248 = vmatprep.subr.bf16.mxu0 0
  %249 = vmatpush1.bf16.msra.mxu0 %v215
  %250 = vmatprep.subr.bf16.mxu0 0
  %251 = vmatpush1.bf16.msra.mxu0 %v216
  %252 = vmatprep.subr.bf16.mxu0 0
  %253 = vmatpush1.bf16.msra.mxu0 %v217
  %254 = vmatprep.subr.bf16.mxu0 0
  %255 = vmatpush1.bf16.msra.mxu0 %v218
  %256 = vmatprep.subr.bf16.mxu0 0
  %257 = vmatpush1.bf16.msra.mxu0 %v219
  %258 = vmatprep.subr.bf16.mxu0 0
  %259 = vmatpush1.bf16.msra.mxu0 %v220
  %260 = vmatprep.subr.bf16.mxu0 0
  %261 = vmatpush1.bf16.msra.mxu0 %v221
  %262 = vmatprep.subr.bf16.mxu0 0
  %263 = vmatpush1.bf16.msra.mxu0 %v222
  %264 = vmatprep.subr.bf16.mxu0 0
  %265 = vmatpush1.bf16.msra.mxu0 %v223
  %266 = vmatprep.subr.bf16.mxu0 0
  %267 = vmatpush1.bf16.msra.mxu0 %v224
  %268 = vmatprep.subr.bf16.mxu0 0
  %269 = vmatpush1.bf16.msra.mxu0 %v225
  %270 = vmatprep.subr.bf16.mxu0 0
  %271 = vmatpush1.bf16.msra.mxu0 %v226
  %272 = vmatprep.subr.bf16.mxu0 0
  %273 = vmatpush1.bf16.msra.mxu0 %v227
  %274 = vmatprep.subr.bf16.mxu0 0
  %275 = vmatpush1.bf16.msra.mxu0 %v228
  %276 = vmatprep.subr.bf16.mxu0 0
  %277 = vmatpush1.bf16.msra.mxu0 %v229
  %278 = vmatprep.mubr.bf16.mxu0 %v119
  %279 = vmatmul.mubr.bf16.gmra.mrb[0].mxu0 %v118
  %v280 = vpop.f32.mrb[0].mxu0
  %v281 = vadd.f32 %v68, %v280
  %v282 = vpop.f32.mrb[0].mxu0
  %v283 = vpop.f32.mrb[0].mxu0
  %v284 = vadd.f32 %v68, %v283
  %v285 = vpop.f32.mrb[0].mxu0
  %286 = vmatprep.mubr.bf16.mxu0 %v121
  %287 = vmatmul.mubr.bf16.gmra.mrb[0].mxu0 %v120
  %v288 = vpop.f32.mrb[0].mxu0
  %v289 = vadd.f32 %v68, %v288
  %v290 = vpop.f32.mrb[0].mxu0
  %v291 = vpop.f32.mrb[0].mxu0
  %v292 = vadd.f32 %v68, %v291
  %v293 = vpop.f32.mrb[0].mxu0
  %294 = vmatprep.mubr.bf16.mxu0 %v123
  %295 = vmatmul.mubr.bf16.gmra.mrb[0].mxu0 %v122
  %v296 = vpop.f32.mrb[0].mxu0
  %v297 = vadd.f32 %v68, %v296
  %v298 = vpop.f32.mrb[0].mxu0
  %v299 = vpop.f32.mrb[0].mxu0
  %v300 = vadd.f32 %v68, %v299
  %v301 = vpop.f32.mrb[0].mxu0
  %302 = vmatprep.mubr.bf16.mxu0 %v125
  %303 = vmatmul.mubr.bf16.gmra.mrb[0].mxu0 %v124
  %v304 = vpop.f32.mrb[0].mxu0
  %v305 = vadd.f32 %v68, %v304
  %v306 = vpop.f32.mrb[0].mxu0
  %v307 = vpop.f32.mrb[0].mxu0
  %v308 = vadd.f32 %v68, %v307
  %v309 = vpop.f32.mrb[0].mxu0
  %310 = vmatprep.mubr.bf16.mxu0 %v127
  %311 = vmatmul.mubr.bf16.gmra.mrb[0].mxu0 %v126
  %v312 = vpop.f32.mrb[0].mxu0
  %v313 = vadd.f32 %v68, %v312
  %v314 = vpop.f32.mrb[0].mxu0
  %v315 = vpop.f32.mrb[0].mxu0
  %v316 = vadd.f32 %v68, %v315
  %v317 = vpop.f32.mrb[0].mxu0
  %318 = vmatprep.mubr.bf16.mxu0 %v129
  %319 = vmatmul.mubr.bf16.gmra.mrb[0].mxu0 %v128
  %v320 = vpop.f32.mrb[0].mxu0
  %v321 = vadd.f32 %v68, %v320
  %v322 = vpop.f32.mrb[0].mxu0
  %v323 = vpop.f32.mrb[0].mxu0
  %v324 = vadd.f32 %v68, %v323
  %v325 = vpop.f32.mrb[0].mxu0
  %326 = vmatprep.mubr.bf16.mxu0 %v131
  %327 = vmatmul.mubr.bf16.gmra.mrb[0].mxu0 %v130
  %v328 = vpop.f32.mrb[0].mxu0
  %v329 = vadd.f32 %v68, %v328
  %v330 = vpop.f32.mrb[0].mxu0
  %v331 = vpop.f32.mrb[0].mxu0
  %v332 = vadd.f32 %v68, %v331
  %v333 = vpop.f32.mrb[0].mxu0
  %334 = vmatprep.mubr.bf16.mxu0 %v133
  %335 = vmatmul.mubr.bf16.gmra.mrb[0].mxu0 %v132
  %v336 = vpop.f32.mrb[0].mxu0
  %v337 = vadd.f32 %v68, %v336
  %v338 = vpop.f32.mrb[0].mxu0
  %v339 = vpop.f32.mrb[0].mxu0
  %v340 = vadd.f32 %v68, %v339
  %v341 = vpop.f32.mrb[0].mxu0
  %342 = vdwg.mxu0
  %343 = vst [vmem:[%s3] sm:$0xff] %v281
  %344 = vst [vmem:[%s3 + $0x8] sm:$0xff] %v284
  %345 = vst [vmem:[%s3 + $0x10] sm:$0xff] %v289
  %346 = vst [vmem:[%s3 + $0x18] sm:$0xff] %v292
  %347 = vst [vmem:[%s3 + $0x20] sm:$0xff] %v297
  %348 = vst [vmem:[%s3 + $0x28] sm:$0xff] %v300
  %349 = vst [vmem:[%s3 + $0x30] sm:$0xff] %v305
  %350 = vst [vmem:[%s3 + $0x38] sm:$0xff] %v308
  %351 = vst [vmem:[%s3 + $0x40] sm:$0xff] %v313
  %352 = vst [vmem:[%s3 + $0x48] sm:$0xff] %v316
  %353 = vst [vmem:[%s3 + $0x50] sm:$0xff] %v321
  %354 = vst [vmem:[%s3 + $0x58] sm:$0xff] %v324
  %355 = vst [vmem:[%s3 + $0x60] sm:$0xff] %v329
  %356 = vst [vmem:[%s3 + $0x68] sm:$0xff] %v332
  %357 = vst [vmem:[%s3 + $0x70] sm:$0xff] %v337
  %358 = vst [vmem:[%s3 + $0x78] sm:$0xff] %v340
  // Predicated region
  $region14: #{_lambda_.5} parent=0 // pred_check
    _
  $region15: #{_lambda_.5} parent=0 // pred_check_branch
    %360 = sbr.rel (0) target = $region17
  $region16: #{_lambda_.5} parent=0 // pred_region
    _
  $region17: #{_lambda_.5} parent=0 // pred_fallthru
    _
  // Predicated region
  $region18: #{_lambda_.5} parent=0 // pred_check
    _
  $region19: #{_lambda_.5} parent=0 // pred_check_branch
    %362 = sbr.rel (0) target = $region21
  $region20: #{_lambda_.5} parent=0 // pred_region
    _
  $region21: #{_lambda_.5} parent=0 // pred_fallthru
    _

// kernel: _lambda_.4
$region0: #{_lambda_.4}
  #allocation0 [shape = 'u32[]', space=smem, size = 0x4, offset = 0x4, fixed_abs, tag = 'smem constant byte address 0x4 - core index']
  #allocation1 [shape = 'u32[144,128]{1,0:T(1,128)}', space=vmem, size = 0x12000, scoped, tag = 'internal scratch']
  %s0 = inlined_call_operand.vmem [shape: bf16[128,1792], index: 0, kind: input, shape index: {}]
  %s1 = inlined_call_operand.vmem [shape: bf16[1792,128], index: 1, kind: input, shape index: {}]
  %s2 = inlined_call_operand.vmem [shape: f32[1,128], index: 2, kind: input, shape index: {}]
  %s3 = inlined_call_operand.vmem [shape: f32[128,128], index: 3, kind: output, shape index: {}]
  %s4 = sld [smem:[#allocation0]]
  $region22: #{_lambda_.4} parent=0
    _
  %s6 = ssub.s32 1, %s4
  %s7 = scalar_select 0, %s6, %s4
  // Predicated region
  $region2: #{_lambda_.4} parent=0 // pred_check
    _
  $region3: #{_lambda_.4} parent=0 // pred_check_branch
    %9 = sbr.rel (0) target = $region5
  $region4: #{_lambda_.4} parent=0 // pred_region
    _
  $region5: #{_lambda_.4} parent=0 // pred_fallthru
    _
  // Predicated region
  $region6: #{_lambda_.4} parent=0 // pred_check
    _
  $region7: #{_lambda_.4} parent=0 // pred_check_branch
    %11 = sbr.rel (0) target = $region9
  $region8: #{_lambda_.4} parent=0 // pred_region
    _
  $region9: #{_lambda_.4} parent=0 // pred_fallthru
    _
  // Predicated region
  $region10: #{_lambda_.4} parent=0 // pred_check
    _
  $region11: #{_lambda_.4} parent=0 // pred_check_branch
    %13 = sbr.rel (0) target = $region13
  $region12: #{_lambda_.4} parent=0 // pred_region
    _
  $region13: #{_lambda_.4} parent=0 // pred_fallthru
    _
  %v15 = vld [vmem:[%s0] sm:$0xff]
  %v16 = vld [vmem:[%s0 + $0x8] sm:$0xff]
  %v17 = vld [vmem:[%s0 + $0x10] sm:$0xff]
  %v18 = vld [vmem:[%s0 + $0x18] sm:$0xff]
  %v19 = vld [vmem:[%s0 + $0x20] sm:$0xff]
  %v20 = vld [vmem:[%s0 + $0x28] sm:$0xff]
  %v21 = vld [vmem:[%s0 + $0x30] sm:$0xff]
  %v22 = vld [vmem:[%s0 + $0x38] sm:$0xff]
  %v23 = vld [vmem:[%s0 + $0x40] sm:$0xff]
  %v24 = vld [vmem:[%s0 + $0x48] sm:$0xff]
  %v25 = vld [vmem:[%s0 + $0x50] sm:$0xff]
  %v26 = vld [vmem:[%s0 + $0x58] sm:$0xff]
  %v27 = vld [vmem:[%s0 + $0x60] sm:$0xff]
  %v28 = vld [vmem:[%s0 + $0x68] sm:$0xff]
  %v29 = vld [vmem:[%s0 + $0x70] sm:$0xff]
  %v30 = vld [vmem:[%s0 + $0x78] sm:$0xff]
  %v31 = vld [vmem:[%s0 + $0x80] sm:$0xff]
  %v32 = vld [vmem:[%s0 + $0x88] sm:$0xff]
  %v33 = vld [vmem:[%s0 + $0x90] sm:$0xff]
  %v34 = vld [vmem:[%s0 + $0x98] sm:$0xff]
  %v35 = vld [vmem:[%s0 + $0xa0] sm:$0xff]
  %v36 = vld [vmem:[%s0 + $0xa8] sm:$0xff]
  %v37 = vld [vmem:[%s0 + $0xb0] sm:$0xff]
  %v38 = vld [vmem:[%s0 + $0xb8] sm:$0xff]
  %v39 = vld [vmem:[%s0 + $0xc0] sm:$0xff]
  %v40 = vld [vmem:[%s0 + $0xc8] sm:$0xff]
  %v41 = vld [vmem:[%s0 + $0xd0] sm:$0xff]
  %v42 = vld [vmem:[%s0 + $0xd8] sm:$0xff]
  %v43 = vld [vmem:[%s0 + $0xe0] sm:$0xff]
  %v44 = vld [vmem:[%s0 + $0xe8] sm:$0xff]
  %v45 = vld [vmem:[%s0 + $0xf0] sm:$0xff]
  %v46 = vld [vmem:[%s0 + $0xf8] sm:$0xff]
  %v47 = vld [vmem:[%s0 + $0x100] sm:$0xff]
  %v48 = vld [vmem:[%s0 + $0x108] sm:$0xff]
  %v49 = vld [vmem:[%s0 + $0x110] sm:$0xff]
  %v50 = vld [vmem:[%s0 + $0x118] sm:$0xff]
  %v51 = vld [vmem:[%s0 + $0x120] sm:$0xff]
  %v52 = vld [vmem:[%s0 + $0x128] sm:$0xff]
  %v53 = vld [vmem:[%s0 + $0x130] sm:$0xff]
  %v54 = vld [vmem:[%s0 + $0x138] sm:$0xff]
  %v55 = vld [vmem:[%s0 + $0x140] sm:$0xff]
  %v56 = vld [vmem:[%s0 + $0x148] sm:$0xff]
  %v57 = vld [vmem:[%s0 + $0x150] sm:$0xff]
  %v58 = vld [vmem:[%s0 + $0x158] sm:$0xff]
  %v59 = vld [vmem:[%s0 + $0x160] sm:$0xff]
  %v60 = vld [vmem:[%s0 + $0x168] sm:$0xff]
  %v61 = vld [vmem:[%s0 + $0x170] sm:$0xff]
  %v62 = vld [vmem:[%s0 + $0x178] sm:$0xff]
  %v63 = vld [vmem:[%s0 + $0x180] sm:$0xff]
  %v64 = vld [vmem:[%s0 + $0x188] sm:$0xff]
  %v65 = vld [vmem:[%s0 + $0x190] sm:$0xff]
  %v66 = vld [vmem:[%s0 + $0x198] sm:$0xff]
  %v67 = vld [vmem:[%s0 + $0x1a0] sm:$0xff]
  %v68 = vld [vmem:[%s0 + $0x1a8] sm:$0xff]
  %v69 = vld [vmem:[%s0 + $0x1b0] sm:$0xff]
  %v70 = vld [vmem:[%s0 + $0x1b8] sm:$0xff]
  %v71 = vld [vmem:[%s0 + $0x1c0] sm:$0xff]
  %v72 = vld [vmem:[%s0 + $0x1c8] sm:$0xff]
  %v73 = vld [vmem:[%s0 + $0x1d0] sm:$0xff]
  %v74 = vld [vmem:[%s0 + $0x1d8] sm:$0xff]
  %v75 = vld [vmem:[%s0 + $0x1e0] sm:$0xff]
  %v76 = vld [vmem:[%s0 + $0x1e8] sm:$0xff]
  %v77 = vld [vmem:[%s0 + $0x1f0] sm:$0xff]
  %v78 = vld [vmem:[%s0 + $0x1f8] sm:$0xff]
  %v79 = vld [vmem:[%s0 + $0x200] sm:$0xff]
  %v80 = vld [vmem:[%s0 + $0x208] sm:$0xff]
  %v81 = vld [vmem:[%s0 + $0x210] sm:$0xff]
  %v82 = vld [vmem:[%s0 + $0x218] sm:$0xff]
  %v83 = vld [vmem:[%s0 + $0x220] sm:$0xff]
  %v84 = vld [vmem:[%s0 + $0x228] sm:$0xff]
  %v85 = vld [vmem:[%s0 + $0x230] sm:$0xff]
  %v86 = vld [vmem:[%s0 + $0x238] sm:$0xff]
  %v87 = vld [vmem:[%s0 + $0x240] sm:$0xff]
  %v88 = vld [vmem:[%s0 + $0x248] sm:$0xff]
  %v89 = vld [vmem:[%s0 + $0x250] sm:$0xff]
  %v90 = vld [vmem:[%s0 + $0x258] sm:$0xff]
  %v91 = vld [vmem:[%s0 + $0x260] sm:$0xff]
  %v92 = vld [vmem:[%s0 + $0x268] sm:$0xff]
  %v93 = vld [vmem:[%s0 + $0x270] sm:$0xff]
  %v94 = vld [vmem:[%s0 + $0x278] sm:$0xff]
  %v95 = vld [vmem:[%s0 + $0x280] sm:$0xff]
  %v96 = vld [vmem:[%s0 + $0x288] sm:$0xff]
  %v97 = vld [vmem:[%s0 + $0x290] sm:$0xff]
  %v98 = vld [vmem:[%s0 + $0x298] sm:$0xff]
  %v99 = vld [vmem:[%s0 + $0x2a0] sm:$0xff]
  %v100 = vld [vmem:[%s0 + $0x2a8] sm:$0xff]
  %v101 = vld [vmem:[%s0 + $0x2b0] sm:$0xff]
  %v102 = vld [vmem:[%s0 + $0x2b8] sm:$0xff]
  %v103 = vld [vmem:[%s0 + $0x2c0] sm:$0xff]
  %v104 = vld [vmem:[%s0 + $0x2c8] sm:$0xff]
  %v105 = vld [vmem:[%s0 + $0x2d0] sm:$0xff]
  %v106 = vld [vmem:[%s0 + $0x2d8] sm:$0xff]
  %v107 = vld [vmem:[%s0 + $0x2e0] sm:$0xff]
  %v108 = vld [vmem:[%s0 + $0x2e8] sm:$0xff]
  %v109 = vld [vmem:[%s0 + $0x2f0] sm:$0xff]
  %v110 = vld [vmem:[%s0 + $0x2f8] sm:$0xff]
  %v111 = vld [vmem:[%s0 + $0x300] sm:$0xff]
  %v112 = vld [vmem:[%s0 + $0x308] sm:$0xff]
  %v113 = vld [vmem:[%s0 + $0x310] sm:$0xff]
  %v114 = vld [vmem:[%s0 + $0x318] sm:$0xff]
  %v115 = vld [vmem:[%s0 + $0x320] sm:$0xff]
  %v116 = vld [vmem:[%s0 + $0x328] sm:$0xff]
  %v117 = vld [vmem:[%s0 + $0x330] sm:$0xff]
  %v118 = vld [vmem:[%s0 + $0x338] sm:$0xff]
  %v119 = vld [vmem:[%s0 + $0x340] sm:$0xff]
  %v120 = vld [vmem:[%s0 + $0x348] sm:$0xff]
  %v121 = vld [vmem:[%s0 + $0x350] sm:$0xff]
  %v122 = vld [vmem:[%s0 + $0x358] sm:$0xff]
  %v123 = vld [vmem:[%s0 + $0x360] sm:$0xff]
  %v124 = vld [vmem:[%s0 + $0x368] sm:$0xff]
  %v125 = vld [vmem:[%s0 + $0x370] sm:$0xff]
  %v126 = vld [vmem:[%s0 + $0x378] sm:$0xff]
  %v127 = vld [vmem:[%s1] sm:$0xf]
  %v128 = vld [vmem:[%s1 + $0x4] sm:$0xf]
  %v129 = vld [vmem:[%s1 + $0x8] sm:$0xf]
  %v130 = vld [vmem:[%s1 + $0xc] sm:$0xf]
  %v131 = vld [vmem:[%s1 + $0x10] sm:$0xf]
  %v132 = vld [vmem:[%s1 + $0x14] sm:$0xf]
  %v133 = vld [vmem:[%s1 + $0x18] sm:$0xf]
  %v134 = vld [vmem:[%s1 + $0x1c] sm:$0xf]
  %v135 = vld [vmem:[%s1 + $0x20] sm:$0xf]
  %v136 = vld [vmem:[%s1 + $0x24] sm:$0xf]
  %v137 = vld [vmem:[%s1 + $0x28] sm:$0xf]
  %v138 = vld [vmem:[%s1 + $0x2c] sm:$0xf]
  %v139 = vld [vmem:[%s1 + $0x30] sm:$0xf]
  %v140 = vld [vmem:[%s1 + $0x34] sm:$0xf]
  %v141 = vld [vmem:[%s1 + $0x38] sm:$0xf]
  %v142 = vld [vmem:[%s1 + $0x3c] sm:$0xf]
  %v143 = vld [vmem:[%s1 + $0x40] sm:$0xf]
  %v144 = vld [vmem:[%s1 + $0x44] sm:$0xf]
  %v145 = vld [vmem:[%s1 + $0x48] sm:$0xf]
  %v146 = vld [vmem:[%s1 + $0x4c] sm:$0xf]
  %v147 = vld [vmem:[%s1 + $0x50] sm:$0xf]
  %v148 = vld [vmem:[%s1 + $0x54] sm:$0xf]
  %v149 = vld [vmem:[%s1 + $0x58] sm:$0xf]
  %v150 = vld [vmem:[%s1 + $0x5c] sm:$0xf]
  %v151 = vld [vmem:[%s1 + $0x60] sm:$0xf]
  %v152 = vld [vmem:[%s1 + $0x64] sm:$0xf]
  %v153 = vld [vmem:[%s1 + $0x68] sm:$0xf]
  %v154 = vld [vmem:[%s1 + $0x6c] sm:$0xf]
  %v155 = vld [vmem:[%s1 + $0x70] sm:$0xf]
  %v156 = vld [vmem:[%s1 + $0x74] sm:$0xf]
  %v157 = vld [vmem:[%s1 + $0x78] sm:$0xf]
  %v158 = vld [vmem:[%s1 + $0x7c] sm:$0xf]
  %v159 = vld [vmem:[%s1 + $0x80] sm:$0xf]
  %v160 = vld [vmem:[%s1 + $0x84] sm:$0xf]
  %v161 = vld [vmem:[%s1 + $0x88] sm:$0xf]
  %v162 = vld [vmem:[%s1 + $0x8c] sm:$0xf]
  %v163 = vld [vmem:[%s1 + $0x90] sm:$0xf]
  %v164 = vld [vmem:[%s1 + $0x94] sm:$0xf]
  %v165 = vld [vmem:[%s1 + $0x98] sm:$0xf]
  %v166 = vld [vmem:[%s1 + $0x9c] sm:$0xf]
  %v167 = vld [vmem:[%s1 + $0xa0] sm:$0xf]
  %v168 = vld [vmem:[%s1 + $0xa4] sm:$0xf]
  %v169 = vld [vmem:[%s1 + $0xa8] sm:$0xf]
  %v170 = vld [vmem:[%s1 + $0xac] sm:$0xf]
  %v171 = vld [vmem:[%s1 + $0xb0] sm:$0xf]
  %v172 = vld [vmem:[%s1 + $0xb4] sm:$0xf]
  %v173 = vld [vmem:[%s1 + $0xb8] sm:$0xf]
  %v174 = vld [vmem:[%s1 + $0xbc] sm:$0xf]
  %v175 = vld [vmem:[%s1 + $0xc0] sm:$0xf]
  %v176 = vld [vmem:[%s1 + $0xc4] sm:$0xf]
  %v177 = vld [vmem:[%s1 + $0xc8] sm:$0xf]
  %v178 = vld [vmem:[%s1 + $0xcc] sm:$0xf]
  %v179 = vld [vmem:[%s1 + $0xd0] sm:$0xf]
  %v180 = vld [vmem:[%s1 + $0xd4] sm:$0xf]
  %v181 = vld [vmem:[%s1 + $0xd8] sm:$0xf]
  %v182 = vld [vmem:[%s1 + $0xdc] sm:$0xf]
  %v183 = vld [vmem:[%s1 + $0xe0] sm:$0xf]
  %v184 = vld [vmem:[%s1 + $0xe4] sm:$0xf]
  %v185 = vld [vmem:[%s1 + $0xe8] sm:$0xf]
  %v186 = vld [vmem:[%s1 + $0xec] sm:$0xf]
  %v187 = vld [vmem:[%s1 + $0xf0] sm:$0xf]
  %v188 = vld [vmem:[%s1 + $0xf4] sm:$0xf]
  %v189 = vld [vmem:[%s1 + $0xf8] sm:$0xf]
  %v190 = vld [vmem:[%s1 + $0xfc] sm:$0xf]
  %v191 = vld [vmem:[%s1 + $0x100] sm:$0xf]
  %v192 = vld [vmem:[%s1 + $0x104] sm:$0xf]
  %v193 = vld [vmem:[%s1 + $0x108] sm:$0xf]
  %v194 = vld [vmem:[%s1 + $0x10c] sm:$0xf]
  %v195 = vld [vmem:[%s1 + $0x110] sm:$0xf]
  %v196 = vld [vmem:[%s1 + $0x114] sm:$0xf]
  %v197 = vld [vmem:[%s1 + $0x118] sm:$0xf]
  %v198 = vld [vmem:[%s1 + $0x11c] sm:$0xf]
  %v199 = vld [vmem:[%s1 + $0x120] sm:$0xf]
  %v200 = vld [vmem:[%s1 + $0x124] sm:$0xf]
  %v201 = vld [vmem:[%s1 + $0x128] sm:$0xf]
  %v202 = vld [vmem:[%s1 + $0x12c] sm:$0xf]
  %v203 = vld [vmem:[%s1 + $0x130] sm:$0xf]
  %v204 = vld [vmem:[%s1 + $0x134] sm:$0xf]
  %v205 = vld [vmem:[%s1 + $0x138] sm:$0xf]
  %v206 = vld [vmem:[%s1 + $0x13c] sm:$0xf]
  %v207 = vld [vmem:[%s1 + $0x140] sm:$0xf]
  %v208 = vld [vmem:[%s1 + $0x144] sm:$0xf]
  %v209 = vld [vmem:[%s1 + $0x148] sm:$0xf]
  %v210 = vld [vmem:[%s1 + $0x14c] sm:$0xf]
  %v211 = vld [vmem:[%s1 + $0x150] sm:$0xf]
  %v212 = vld [vmem:[%s1 + $0x154] sm:$0xf]
  %v213 = vld [vmem:[%s1 + $0x158] sm:$0xf]
  %v214 = vld [vmem:[%s1 + $0x15c] sm:$0xf]
  %v215 = vld [vmem:[%s1 + $0x160] sm:$0xf]
  %v216 = vld [vmem:[%s1 + $0x164] sm:$0xf]
  %v217 = vld [vmem:[%s1 + $0x168] sm:$0xf]
  %v218 = vld [vmem:[%s1 + $0x16c] sm:$0xf]
  %v219 = vld [vmem:[%s1 + $0x170] sm:$0xf]
  %v220 = vld [vmem:[%s1 + $0x174] sm:$0xf]
  %v221 = vld [vmem:[%s1 + $0x178] sm:$0xf]
  %v222 = vld [vmem:[%s1 + $0x17c] sm:$0xf]
  %v223 = vld [vmem:[%s1 + $0x180] sm:$0xf]
  %v224 = vld [vmem:[%s1 + $0x184] sm:$0xf]
  %v225 = vld [vmem:[%s1 + $0x188] sm:$0xf]
  %v226 = vld [vmem:[%s1 + $0x18c] sm:$0xf]
  %v227 = vld [vmem:[%s1 + $0x190] sm:$0xf]
  %v228 = vld [vmem:[%s1 + $0x194] sm:$0xf]
  %v229 = vld [vmem:[%s1 + $0x198] sm:$0xf]
  %v230 = vld [vmem:[%s1 + $0x19c] sm:$0xf]
  %v231 = vld [vmem:[%s1 + $0x1a0] sm:$0xf]
  %v232 = vld [vmem:[%s1 + $0x1a4] sm:$0xf]
  %v233 = vld [vmem:[%s1 + $0x1a8] sm:$0xf]
  %v234 = vld [vmem:[%s1 + $0x1ac] sm:$0xf]
  %v235 = vld [vmem:[%s1 + $0x1b0] sm:$0xf]
  %v236 = vld [vmem:[%s1 + $0x1b4] sm:$0xf]
  %v237 = vld [vmem:[%s1 + $0x1b8] sm:$0xf]
  %v238 = vld [vmem:[%s1 + $0x1bc] sm:$0xf]
  %v239 = vld [vmem:[%s1 + $0x1c0] sm:$0xf]
  %v240 = vld [vmem:[%s1 + $0x1c4] sm:$0xf]
  %v241 = vld [vmem:[%s1 + $0x1c8] sm:$0xf]
  %v242 = vld [vmem:[%s1 + $0x1cc] sm:$0xf]
  %v243 = vld [vmem:[%s1 + $0x1d0] sm:$0xf]
  %v244 = vld [vmem:[%s1 + $0x1d4] sm:$0xf]
  %v245 = vld [vmem:[%s1 + $0x1d8] sm:$0xf]
  %v246 = vld [vmem:[%s1 + $0x1dc] sm:$0xf]
  %v247 = vld [vmem:[%s1 + $0x1e0] sm:$0xf]
  %v248 = vld [vmem:[%s1 + $0x1e4] sm:$0xf]
  %v249 = vld [vmem:[%s1 + $0x1e8] sm:$0xf]
  %v250 = vld [vmem:[%s1 + $0x1ec] sm:$0xf]
  %v251 = vld [vmem:[%s1 + $0x1f0] sm:$0xf]
  %v252 = vld [vmem:[%s1 + $0x1f4] sm:$0xf]
  %v253 = vld [vmem:[%s1 + $0x1f8] sm:$0xf]
  %v254 = vld [vmem:[%s1 + $0x1fc] sm:$0xf]
  %v255 = vld [vmem:[%s1 + $0x200] sm:$0xf]
  %v256 = vld [vmem:[%s1 + $0x204] sm:$0xf]
  %v257 = vld [vmem:[%s1 + $0x208] sm:$0xf]
  %v258 = vld [vmem:[%s1 + $0x20c] sm:$0xf]
  %v259 = vld [vmem:[%s1 + $0x210] sm:$0xf]
  %v260 = vld [vmem:[%s1 + $0x214] sm:$0xf]
  %v261 = vld [vmem:[%s1 + $0x218] sm:$0xf]
  %v262 = vld [vmem:[%s1 + $0x21c] sm:$0xf]
  %v263 = vld [vmem:[%s1 + $0x220] sm:$0xf]
  %v264 = vld [vmem:[%s1 + $0x224] sm:$0xf]
  %v265 = vld [vmem:[%s1 + $0x228] sm:$0xf]
  %v266 = vld [vmem:[%s1 + $0x22c] sm:$0xf]
  %v267 = vld [vmem:[%s1 + $0x230] sm:$0xf]
  %v268 = vld [vmem:[%s1 + $0x234] sm:$0xf]
  %v269 = vld [vmem:[%s1 + $0x238] sm:$0xf]
  %v270 = vld [vmem:[%s1 + $0x23c] sm:$0xf]
  %v271 = vld [vmem:[%s1 + $0x240] sm:$0xf]
  %v272 = vld [vmem:[%s1 + $0x244] sm:$0xf]
  %v273 = vld [vmem:[%s1 + $0x248] sm:$0xf]
  %v274 = vld [vmem:[%s1 + $0x24c] sm:$0xf]
  %v275 = vld [vmem:[%s1 + $0x250] sm:$0xf]
  %v276 = vld [vmem:[%s1 + $0x254] sm:$0xf]
  %v277 = vld [vmem:[%s1 + $0x258] sm:$0xf]
  %v278 = vld [vmem:[%s1 + $0x25c] sm:$0xf]
  %v279 = vld [vmem:[%s1 + $0x260] sm:$0xf]
  %v280 = vld [vmem:[%s1 + $0x264] sm:$0xf]
  %v281 = vld [vmem:[%s1 + $0x268] sm:$0xf]
  %v282 = vld [vmem:[%s1 + $0x26c] sm:$0xf]
  %v283 = vld [vmem:[%s1 + $0x270] sm:$0xf]
  %v284 = vld [vmem:[%s1 + $0x274] sm:$0xf]
  %v285 = vld [vmem:[%s1 + $0x278] sm:$0xf]
  %v286 = vld [vmem:[%s1 + $0x27c] sm:$0xf]
  %v287 = vld [vmem:[%s1 + $0x280] sm:$0xf]
  %v288 = vld [vmem:[%s1 + $0x284] sm:$0xf]
  %v289 = vld [vmem:[%s1 + $0x288] sm:$0xf]
  %v290 = vld [vmem:[%s1 + $0x28c] sm:$0xf]
  %v291 = vld [vmem:[%s1 + $0x290] sm:$0xf]
  %v292 = vld [vmem:[%s1 + $0x294] sm:$0xf]
  %v293 = vld [vmem:[%s1 + $0x298] sm:$0xf]
  %v294 = vld [vmem:[%s1 + $0x29c] sm:$0xf]
  %v295 = vld [vmem:[%s1 + $0x2a0] sm:$0xf]
  %v296 = vld [vmem:[%s1 + $0x2a4] sm:$0xf]
  %v297 = vld [vmem:[%s1 + $0x2a8] sm:$0xf]
  %v298 = vld [vmem:[%s1 + $0x2ac] sm:$0xf]
  %v299 = vld [vmem:[%s1 + $0x2b0] sm:$0xf]
  %v300 = vld [vmem:[%s1 + $0x2b4] sm:$0xf]
  %v301 = vld [vmem:[%s1 + $0x2b8] sm:$0xf]
  %v302 = vld [vmem:[%s1 + $0x2bc] sm:$0xf]
  %v303 = vld [vmem:[%s1 + $0x2c0] sm:$0xf]
  %v304 = vld [vmem:[%s1 + $0x2c4] sm:$0xf]
  %v305 = vld [vmem:[%s1 + $0x2c8] sm:$0xf]
  %v306 = vld [vmem:[%s1 + $0x2cc] sm:$0xf]
  %v307 = vld [vmem:[%s1 + $0x2d0] sm:$0xf]
  %v308 = vld [vmem:[%s1 + $0x2d4] sm:$0xf]
  %v309 = vld [vmem:[%s1 + $0x2d8] sm:$0xf]
  %v310 = vld [vmem:[%s1 + $0x2dc] sm:$0xf]
  %v311 = vld [vmem:[%s1 + $0x2e0] sm:$0xf]
  %v312 = vld [vmem:[%s1 + $0x2e4] sm:$0xf]
  %v313 = vld [vmem:[%s1 + $0x2e8] sm:$0xf]
  %v314 = vld [vmem:[%s1 + $0x2ec] sm:$0xf]
  %v315 = vld [vmem:[%s1 + $0x2f0] sm:$0xf]
  %v316 = vld [vmem:[%s1 + $0x2f4] sm:$0xf]
  %v317 = vld [vmem:[%s1 + $0x2f8] sm:$0xf]
  %v318 = vld [vmem:[%s1 + $0x2fc] sm:$0xf]
  %v319 = vld [vmem:[%s1 + $0x300] sm:$0xf]
  %v320 = vld [vmem:[%s1 + $0x304] sm:$0xf]
  %v321 = vld [vmem:[%s1 + $0x308] sm:$0xf]
  %v322 = vld [vmem:[%s1 + $0x30c] sm:$0xf]
  %v323 = vld [vmem:[%s1 + $0x310] sm:$0xf]
  %v324 = vld [vmem:[%s1 + $0x314] sm:$0xf]
  %v325 = vld [vmem:[%s1 + $0x318] sm:$0xf]
  %v326 = vld [vmem:[%s1 + $0x31c] sm:$0xf]
  %v327 = vld [vmem:[%s1 + $0x320] sm:$0xf]
  %v328 = vld [vmem:[%s1 + $0x324] sm:$0xf]
  %v329 = vld [vmem:[%s1 + $0x328] sm:$0xf]
  %v330 = vld [vmem:[%s1 + $0x32c] sm:$0xf]
  %v331 = vld [vmem:[%s1 + $0x330] sm:$0xf]
  %v332 = vld [vmem:[%s1 + $0x334] sm:$0xf]
  %v333 = vld [vmem:[%s1 + $0x338] sm:$0xf]
  %v334 = vld [vmem:[%s1 + $0x33c] sm:$0xf]
  %v335 = vld [vmem:[%s1 + $0x340] sm:$0xf]
  %v336 = vld [vmem:[%s1 + $0x344] sm:$0xf]
  %v337 = vld [vmem:[%s1 + $0x348] sm:$0xf]
  %v338 = vld [vmem:[%s1 + $0x34c] sm:$0xf]
  %v339 = vld [vmem:[%s1 + $0x350] sm:$0xf]
  %v340 = vld [vmem:[%s1 + $0x354] sm:$0xf]
  %v341 = vld [vmem:[%s1 + $0x358] sm:$0xf]
  %v342 = vld [vmem:[%s1 + $0x35c] sm:$0xf]
  %v343 = vld [vmem:[%s1 + $0x360] sm:$0xf]
  %v344 = vld [vmem:[%s1 + $0x364] sm:$0xf]
  %v345 = vld [vmem:[%s1 + $0x368] sm:$0xf]
  %v346 = vld [vmem:[%s1 + $0x36c] sm:$0xf]
  %v347 = vld [vmem:[%s1 + $0x370] sm:$0xf]
  %v348 = vld [vmem:[%s1 + $0x374] sm:$0xf]
  %v349 = vld [vmem:[%s1 + $0x378] sm:$0xf]
  %v350 = vld [vmem:[%s1 + $0x37c] sm:$0xf]
  %v351 = vld [vmem:[%s2] sm:$0x1]
  %v353 = vlaneseq
  %v354 = vshrl.u32 %v353, 7
  %v355 = vsub.s32 0, %v354
  %v356 = vrot.slane %v351, %v355
  %v470 = vunpack.c.l.b16 %v15
  %v471 = vunpack.c.h.b16 %v15
  %v472 = vunpack.c.l.b16 %v16
  %v473 = vunpack.c.h.b16 %v16
  %v474 = vunpack.c.l.b16 %v17
  %v475 = vunpack.c.h.b16 %v17
  %v476 = vunpack.c.l.b16 %v18
  %v477 = vunpack.c.h.b16 %v18
  %v478 = vunpack.c.l.b16 %v19
  %v479 = vunpack.c.h.b16 %v19
  %v480 = vunpack.c.l.b16 %v20
  %v481 = vunpack.c.h.b16 %v20
  %v482 = vunpack.c.l.b16 %v21
  %v483 = vunpack.c.h.b16 %v21
  %v484 = vunpack.c.l.b16 %v22
  %v485 = vunpack.c.h.b16 %v22
  %v486 = vunpack.c.l.b16 %v23
  %v487 = vunpack.c.h.b16 %v23
  %v488 = vunpack.c.l.b16 %v24
  %v489 = vunpack.c.h.b16 %v24
  %v490 = vunpack.c.l.b16 %v25
  %v491 = vunpack.c.h.b16 %v25
  %v492 = vunpack.c.l.b16 %v26
  %v493 = vunpack.c.h.b16 %v26
  %v494 = vunpack.c.l.b16 %v27
  %v495 = vunpack.c.h.b16 %v27
  %v496 = vunpack.c.l.b16 %v28
  %v497 = vunpack.c.h.b16 %v28
  %v498 = vunpack.c.l.b16 %v29
  %v499 = vunpack.c.h.b16 %v29
  %v500 = vunpack.c.l.b16 %v30
  %v501 = vunpack.c.h.b16 %v30
  %v502 = vunpack.c.l.b16 %v31
  %v503 = vunpack.c.h.b16 %v31
  %v504 = vunpack.c.l.b16 %v32
  %v505 = vunpack.c.h.b16 %v32
  %v506 = vunpack.c.l.b16 %v33
  %v507 = vunpack.c.h.b16 %v33
  %v508 = vunpack.c.l.b16 %v34
  %v509 = vunpack.c.h.b16 %v34
  %v510 = vunpack.c.l.b16 %v35
  %v511 = vunpack.c.h.b16 %v35
  %v512 = vunpack.c.l.b16 %v36
  %v513 = vunpack.c.h.b16 %v36
  %v514 = vunpack.c.l.b16 %v37
  %v515 = vunpack.c.h.b16 %v37
  %v516 = vunpack.c.l.b16 %v38
  %v517 = vunpack.c.h.b16 %v38
  %v518 = vunpack.c.l.b16 %v39
  %v519 = vunpack.c.h.b16 %v39
  %v520 = vunpack.c.l.b16 %v40
  %v521 = vunpack.c.h.b16 %v40
  %v522 = vunpack.c.l.b16 %v41
  %v523 = vunpack.c.h.b16 %v41
  %v524 = vunpack.c.l.b16 %v42
  %v525 = vunpack.c.h.b16 %v42
  %v526 = vunpack.c.l.b16 %v43
  %v527 = vunpack.c.h.b16 %v43
  %v528 = vunpack.c.l.b16 %v44
  %v529 = vunpack.c.h.b16 %v44
  %v530 = vunpack.c.l.b16 %v45
  %v531 = vunpack.c.h.b16 %v45
  %v532 = vunpack.c.l.b16 %v46
  %v533 = vunpack.c.h.b16 %v46
  %v534 = vunpack.c.l.b16 %v47
  %v535 = vunpack.c.h.b16 %v47
  %v536 = vunpack.c.l.b16 %v48
  %v537 = vunpack.c.h.b16 %v48
  %v538 = vunpack.c.l.b16 %v49
  %v539 = vunpack.c.h.b16 %v49
  %v540 = vunpack.c.l.b16 %v50
  %v541 = vunpack.c.h.b16 %v50
  %v542 = vunpack.c.l.b16 %v51
  %v543 = vunpack.c.h.b16 %v51
  %v544 = vunpack.c.l.b16 %v52
  %v545 = vunpack.c.h.b16 %v52
  %v546 = vunpack.c.l.b16 %v53
  %v547 = vunpack.c.h.b16 %v53
  %v548 = vunpack.c.l.b16 %v54
  %v549 = vunpack.c.h.b16 %v54
  %v550 = vunpack.c.l.b16 %v55
  %v551 = vunpack.c.h.b16 %v55
  %v552 = vunpack.c.l.b16 %v56
  %v553 = vunpack.c.h.b16 %v56
  %v554 = vunpack.c.l.b16 %v57
  %v555 = vunpack.c.h.b16 %v57
  %v556 = vunpack.c.l.b16 %v58
  %v557 = vunpack.c.h.b16 %v58
  %v558 = vunpack.c.l.b16 %v59
  %v559 = vunpack.c.h.b16 %v59
  %v560 = vunpack.c.l.b16 %v60
  %v561 = vunpack.c.h.b16 %v60
  %v562 = vunpack.c.l.b16 %v61
  %v563 = vunpack.c.h.b16 %v61
  %v564 = vunpack.c.l.b16 %v62
  %v565 = vunpack.c.h.b16 %v62
  %v566 = vunpack.c.l.b16 %v63
  %v567 = vunpack.c.h.b16 %v63
  %v568 = vunpack.c.l.b16 %v64
  %v569 = vunpack.c.h.b16 %v64
  %v570 = vunpack.c.l.b16 %v65
  %v571 = vunpack.c.h.b16 %v65
  %v572 = vunpack.c.l.b16 %v66
  %v573 = vunpack.c.h.b16 %v66
  %v574 = vunpack.c.l.b16 %v67
  %v575 = vunpack.c.h.b16 %v67
  %v576 = vunpack.c.l.b16 %v68
  %v577 = vunpack.c.h.b16 %v68
  %v578 = vunpack.c.l.b16 %v69
  %v579 = vunpack.c.h.b16 %v69
  %v580 = vunpack.c.l.b16 %v70
  %v581 = vunpack.c.h.b16 %v70
  %v582 = vunpack.c.l.b16 %v71
  %v583 = vunpack.c.h.b16 %v71
  %v584 = vunpack.c.l.b16 %v72
  %v585 = vunpack.c.h.b16 %v72
  %v586 = vunpack.c.l.b16 %v73
  %v587 = vunpack.c.h.b16 %v73
  %v588 = vunpack.c.l.b16 %v74
  %v589 = vunpack.c.h.b16 %v74
  %v590 = vunpack.c.l.b16 %v75
  %v591 = vunpack.c.h.b16 %v75
  %v592 = vunpack.c.l.b16 %v76
  %v593 = vunpack.c.h.b16 %v76
  %v594 = vunpack.c.l.b16 %v77
  %v595 = vunpack.c.h.b16 %v77
  %v596 = vunpack.c.l.b16 %v78
  %v597 = vunpack.c.h.b16 %v78
  %v598 = vunpack.c.l.b16 %v79
  %v599 = vunpack.c.h.b16 %v79
  %v600 = vunpack.c.l.b16 %v80
  %v601 = vunpack.c.h.b16 %v80
  %v602 = vunpack.c.l.b16 %v81
  %v603 = vunpack.c.h.b16 %v81
  %v604 = vunpack.c.l.b16 %v82
  %v605 = vunpack.c.h.b16 %v82
  %v606 = vunpack.c.l.b16 %v83
  %v607 = vunpack.c.h.b16 %v83
  %v608 = vunpack.c.l.b16 %v84
  %v609 = vunpack.c.h.b16 %v84
  %v610 = vunpack.c.l.b16 %v85
  %v611 = vunpack.c.h.b16 %v85
  %v612 = vunpack.c.l.b16 %v86
  %v613 = vunpack.c.h.b16 %v86
  %v614 = vunpack.c.l.b16 %v87
  %v615 = vunpack.c.h.b16 %v87
  %v616 = vunpack.c.l.b16 %v88
  %v617 = vunpack.c.h.b16 %v88
  %v618 = vunpack.c.l.b16 %v89
  %v619 = vunpack.c.h.b16 %v89
  %v620 = vunpack.c.l.b16 %v90
  %v621 = vunpack.c.h.b16 %v90
  %v622 = vunpack.c.l.b16 %v91
  %v623 = vunpack.c.h.b16 %v91
  %v624 = vunpack.c.l.b16 %v92
  %v625 = vunpack.c.h.b16 %v92
  %v626 = vunpack.c.l.b16 %v93
  %v627 = vunpack.c.h.b16 %v93
  %v628 = vunpack.c.l.b16 %v94
  %v629 = vunpack.c.h.b16 %v94
  %v630 = vunpack.c.l.b16 %v95
  %v631 = vunpack.c.h.b16 %v95
  %v632 = vunpack.c.l.b16 %v96
  %v633 = vunpack.c.h.b16 %v96
  %v634 = vunpack.c.l.b16 %v97
  %v635 = vunpack.c.h.b16 %v97
  %v636 = vunpack.c.l.b16 %v98
  %v637 = vunpack.c.h.b16 %v98
  %v638 = vunpack.c.l.b16 %v99
  %v639 = vunpack.c.h.b16 %v99
  %v640 = vunpack.c.l.b16 %v100
  %v641 = vunpack.c.h.b16 %v100
  %v642 = vunpack.c.l.b16 %v101
  %v643 = vunpack.c.h.b16 %v101
  %v644 = vunpack.c.l.b16 %v102
  %v645 = vunpack.c.h.b16 %v102
  %v646 = vunpack.c.l.b16 %v103
  %v647 = vunpack.c.h.b16 %v103
  %v648 = vunpack.c.l.b16 %v104
  %v649 = vunpack.c.h.b16 %v104
  %v650 = vunpack.c.l.b16 %v105
  %v651 = vunpack.c.h.b16 %v105
  %v652 = vunpack.c.l.b16 %v106
  %v653 = vunpack.c.h.b16 %v106
  %v654 = vunpack.c.l.b16 %v107
  %v655 = vunpack.c.h.b16 %v107
  %v656 = vunpack.c.l.b16 %v108
  %v657 = vunpack.c.h.b16 %v108
  %v658 = vunpack.c.l.b16 %v109
  %v659 = vunpack.c.h.b16 %v109
  %v660 = vunpack.c.l.b16 %v110
  %v661 = vunpack.c.h.b16 %v110
  %v662 = vunpack.c.l.b16 %v111
  %v663 = vunpack.c.h.b16 %v111
  %v664 = vunpack.c.l.b16 %v112
  %v665 = vunpack.c.h.b16 %v112
  %v666 = vunpack.c.l.b16 %v113
  %v667 = vunpack.c.h.b16 %v113
  %v668 = vunpack.c.l.b16 %v114
  %v669 = vunpack.c.h.b16 %v114
  %v670 = vunpack.c.l.b16 %v115
  %v671 = vunpack.c.h.b16 %v115
  %v672 = vunpack.c.l.b16 %v116
  %v673 = vunpack.c.h.b16 %v116
  %v674 = vunpack.c.l.b16 %v117
  %v675 = vunpack.c.h.b16 %v117
  %v676 = vunpack.c.l.b16 %v118
  %v677 = vunpack.c.h.b16 %v118
  %v678 = vunpack.c.l.b16 %v119
  %v679 = vunpack.c.h.b16 %v119
  %v680 = vunpack.c.l.b16 %v120
  %v681 = vunpack.c.h.b16 %v120
  %v682 = vunpack.c.l.b16 %v121
  %v683 = vunpack.c.h.b16 %v121
  %v684 = vunpack.c.l.b16 %v122
  %v685 = vunpack.c.h.b16 %v122
  %v686 = vunpack.c.l.b16 %v123
  %v687 = vunpack.c.h.b16 %v123
  %v688 = vunpack.c.l.b16 %v124
  %v689 = vunpack.c.h.b16 %v124
  %v690 = vunpack.c.l.b16 %v125
  %v691 = vunpack.c.h.b16 %v125
  %v692 = vunpack.c.l.b16 %v126
  %v693 = vunpack.c.h.b16 %v126
  %v694 = vpack.c.b16 %v484, %v470
  %v695 = vpack.c.b16 %v485, %v471
  %v696 = vpack.c.b16 %v486, %v472
  %v697 = vpack.c.b16 %v487, %v473
  %v698 = vpack.c.b16 %v488, %v474
  %v699 = vpack.c.b16 %v489, %v475
  %v700 = vpack.c.b16 %v490, %v476
  %v701 = vpack.c.b16 %v491, %v477
  %v702 = vpack.c.b16 %v492, %v478
  %v703 = vpack.c.b16 %v493, %v479
  %v704 = vpack.c.b16 %v494, %v480
  %v705 = vpack.c.b16 %v495, %v481
  %v706 = vpack.c.b16 %v496, %v482
  %v707 = vpack.c.b16 %v497, %v483
  %v708 = vpack.c.b16 %v512, %v498
  %v709 = vpack.c.b16 %v513, %v499
  %v710 = vpack.c.b16 %v514, %v500
  %v711 = vpack.c.b16 %v515, %v501
  %v712 = vpack.c.b16 %v516, %v502
  %v713 = vpack.c.b16 %v517, %v503
  %v714 = vpack.c.b16 %v518, %v504
  %v715 = vpack.c.b16 %v519, %v505
  %v716 = vpack.c.b16 %v520, %v506
  %v717 = vpack.c.b16 %v521, %v507
  %v718 = vpack.c.b16 %v522, %v508
  %v719 = vpack.c.b16 %v523, %v509
  %v720 = vpack.c.b16 %v524, %v510
  %v721 = vpack.c.b16 %v525, %v511
  %v722 = vpack.c.b16 %v540, %v526
  %v723 = vpack.c.b16 %v541, %v527
  %v724 = vpack.c.b16 %v542, %v528
  %v725 = vpack.c.b16 %v543, %v529
  %v726 = vpack.c.b16 %v544, %v530
  %v727 = vpack.c.b16 %v545, %v531
  %v728 = vpack.c.b16 %v546, %v532
  %v729 = vpack.c.b16 %v547, %v533
  %v730 = vpack.c.b16 %v548, %v534
  %v731 = vpack.c.b16 %v549, %v535
  %v732 = vpack.c.b16 %v550, %v536
  %v733 = vpack.c.b16 %v551, %v537
  %v734 = vpack.c.b16 %v552, %v538
  %v735 = vpack.c.b16 %v553, %v539
  %v736 = vpack.c.b16 %v568, %v554
  %v737 = vpack.c.b16 %v569, %v555
  %v738 = vpack.c.b16 %v570, %v556
  %v739 = vpack.c.b16 %v571, %v557
  %v740 = vpack.c.b16 %v572, %v558
  %v741 = vpack.c.b16 %v573, %v559
  %v742 = vpack.c.b16 %v574, %v560
  %v743 = vpack.c.b16 %v575, %v561
  %v744 = vpack.c.b16 %v576, %v562
  %v745 = vpack.c.b16 %v577, %v563
  %v746 = vpack.c.b16 %v578, %v564
  %v747 = vpack.c.b16 %v579, %v565
  %v748 = vpack.c.b16 %v580, %v566
  %v749 = vpack.c.b16 %v581, %v567
  %v750 = vpack.c.b16 %v596, %v582
  %v751 = vpack.c.b16 %v597, %v583
  %v752 = vpack.c.b16 %v598, %v584
  %v753 = vpack.c.b16 %v599, %v585
  %v754 = vpack.c.b16 %v600, %v586
  %v755 = vpack.c.b16 %v601, %v587
  %v756 = vpack.c.b16 %v602, %v588
  %v757 = vpack.c.b16 %v603, %v589
  %v758 = vpack.c.b16 %v604, %v590
  %v759 = vpack.c.b16 %v605, %v591
  %v760 = vpack.c.b16 %v606, %v592
  %v761 = vpack.c.b16 %v607, %v593
  %v762 = vpack.c.b16 %v608, %v594
  %v763 = vpack.c.b16 %v609, %v595
  %v764 = vpack.c.b16 %v624, %v610
  %v765 = vpack.c.b16 %v625, %v611
  %v766 = vpack.c.b16 %v626, %v612
  %v767 = vpack.c.b16 %v627, %v613
  %v768 = vpack.c.b16 %v628, %v614
  %v769 = vpack.c.b16 %v629, %v615
  %v770 = vpack.c.b16 %v630, %v616
  %v771 = vpack.c.b16 %v631, %v617
  %v772 = vpack.c.b16 %v632, %v618
  %v773 = vpack.c.b16 %v633, %v619
  %v774 = vpack.c.b16 %v634, %v620
  %v775 = vpack.c.b16 %v635, %v621
  %v776 = vpack.c.b16 %v636, %v622
  %v777 = vpack.c.b16 %v637, %v623
  %v778 = vpack.c.b16 %v652, %v638
  %v779 = vpack.c.b16 %v653, %v639
  %v780 = vpack.c.b16 %v654, %v640
  %v781 = vpack.c.b16 %v655, %v641
  %v782 = vpack.c.b16 %v656, %v642
  %v783 = vpack.c.b16 %v657, %v643
  %v784 = vpack.c.b16 %v658, %v644
  %v785 = vpack.c.b16 %v659, %v645
  %v786 = vpack.c.b16 %v660, %v646
  %v787 = vpack.c.b16 %v661, %v647
  %v788 = vpack.c.b16 %v662, %v648
  %v789 = vpack.c.b16 %v663, %v649
  %v790 = vpack.c.b16 %v664, %v650
  %v791 = vpack.c.b16 %v665, %v651
  %v792 = vpack.c.b16 %v680, %v666
  %v793 = vpack.c.b16 %v681, %v667
  %v794 = vpack.c.b16 %v682, %v668
  %v795 = vpack.c.b16 %v683, %v669
  %v796 = vpack.c.b16 %v684, %v670
  %v797 = vpack.c.b16 %v685, %v671
  %v798 = vpack.c.b16 %v686, %v672
  %v799 = vpack.c.b16 %v687, %v673
  %v800 = vpack.c.b16 %v688, %v674
  %v801 = vpack.c.b16 %v689, %v675
  %v802 = vpack.c.b16 %v690, %v676
  %v803 = vpack.c.b16 %v691, %v677
  %v804 = vpack.c.b16 %v692, %v678
  %v805 = vpack.c.b16 %v693, %v679
  %v1142 = vunpack.c.l.b16 %v127
  %v1143 = vunpack.c.l.b16 %v128
  %v1144 = vunpack.c.l.b16 %v129
  %v1145 = vunpack.c.l.b16 %v130
  %v1146 = vunpack.c.l.b16 %v131
  %v1147 = vunpack.c.l.b16 %v132
  %v1148 = vunpack.c.l.b16 %v133
  %v1149 = vunpack.c.l.b16 %v134
  %v1150 = vunpack.c.l.b16 %v135
  %v1151 = vunpack.c.l.b16 %v136
  %v1152 = vunpack.c.l.b16 %v137
  %v1153 = vunpack.c.l.b16 %v138
  %v1154 = vunpack.c.l.b16 %v139
  %v1155 = vunpack.c.l.b16 %v140
  %v1156 = vunpack.c.l.b16 %v141
  %v1157 = vunpack.c.l.b16 %v142
  %v1158 = vunpack.c.l.b16 %v143
  %v1159 = vunpack.c.l.b16 %v144
  %v1160 = vunpack.c.l.b16 %v145
  %v1161 = vunpack.c.l.b16 %v146
  %v1162 = vunpack.c.l.b16 %v147
  %v1163 = vunpack.c.l.b16 %v148
  %v1164 = vunpack.c.l.b16 %v149
  %v1165 = vunpack.c.l.b16 %v150
  %v1166 = vunpack.c.l.b16 %v151
  %v1167 = vunpack.c.l.b16 %v152
  %v1168 = vunpack.c.l.b16 %v153
  %v1169 = vunpack.c.l.b16 %v154
  %v1170 = vunpack.c.l.b16 %v155
  %v1171 = vunpack.c.l.b16 %v156
  %v1172 = vunpack.c.l.b16 %v157
  %v1173 = vunpack.c.l.b16 %v158
  %v1174 = vunpack.c.l.b16 %v159
  %v1175 = vunpack.c.l.b16 %v160
  %v1176 = vunpack.c.l.b16 %v161
  %v1177 = vunpack.c.l.b16 %v162
  %v1178 = vunpack.c.l.b16 %v163
  %v1179 = vunpack.c.l.b16 %v164
  %v1180 = vunpack.c.l.b16 %v165
  %v1181 = vunpack.c.l.b16 %v166
  %v1182 = vunpack.c.l.b16 %v167
  %v1183 = vunpack.c.l.b16 %v168
  %v1184 = vunpack.c.l.b16 %v169
  %v1185 = vunpack.c.l.b16 %v170
  %v1186 = vunpack.c.l.b16 %v171
  %v1187 = vunpack.c.l.b16 %v172
  %v1188 = vunpack.c.l.b16 %v173
  %v1189 = vunpack.c.l.b16 %v174
  %v1190 = vunpack.c.l.b16 %v175
  %v1191 = vunpack.c.l.b16 %v176
  %v1192 = vunpack.c.l.b16 %v177
  %v1193 = vunpack.c.l.b16 %v178
  %v1194 = vunpack.c.l.b16 %v179
  %v1195 = vunpack.c.l.b16 %v180
  %v1196 = vunpack.c.l.b16 %v181
  %v1197 = vunpack.c.l.b16 %v182
  %v1198 = vunpack.c.l.b16 %v183
  %v1199 = vunpack.c.l.b16 %v184
  %v1200 = vunpack.c.l.b16 %v185
  %v1201 = vunpack.c.l.b16 %v186
  %v1202 = vunpack.c.l.b16 %v187
  %v1203 = vunpack.c.l.b16 %v188
  %v1204 = vunpack.c.l.b16 %v189
  %v1205 = vunpack.c.l.b16 %v190
  %v1206 = vunpack.c.l.b16 %v191
  %v1207 = vunpack.c.l.b16 %v192
  %v1208 = vunpack.c.l.b16 %v193
  %v1209 = vunpack.c.l.b16 %v194
  %v1210 = vunpack.c.l.b16 %v195
  %v1211 = vunpack.c.l.b16 %v196
  %v1212 = vunpack.c.l.b16 %v197
  %v1213 = vunpack.c.l.b16 %v198
  %v1214 = vunpack.c.l.b16 %v199
  %v1215 = vunpack.c.l.b16 %v200
  %v1216 = vunpack.c.l.b16 %v201
  %v1217 = vunpack.c.l.b16 %v202
  %v1218 = vunpack.c.l.b16 %v203
  %v1219 = vunpack.c.l.b16 %v204
  %v1220 = vunpack.c.l.b16 %v205
  %v1221 = vunpack.c.l.b16 %v206
  %v1222 = vunpack.c.l.b16 %v207
  %v1223 = vunpack.c.l.b16 %v208
  %v1224 = vunpack.c.l.b16 %v209
  %v1225 = vunpack.c.l.b16 %v210
  %v1226 = vunpack.c.l.b16 %v211
  %v1227 = vunpack.c.l.b16 %v212
  %v1228 = vunpack.c.l.b16 %v213
  %v1229 = vunpack.c.l.b16 %v214
  %v1230 = vunpack.c.l.b16 %v215
  %v1231 = vunpack.c.l.b16 %v216
  %v1232 = vunpack.c.l.b16 %v217
  %v1233 = vunpack.c.l.b16 %v218
  %v1234 = vunpack.c.l.b16 %v219
  %v1235 = vunpack.c.l.b16 %v220
  %v1236 = vunpack.c.l.b16 %v221
  %v1237 = vunpack.c.l.b16 %v222
  %v1238 = vunpack.c.l.b16 %v223
  %v1239 = vunpack.c.l.b16 %v224
  %v1240 = vunpack.c.l.b16 %v225
  %v1241 = vunpack.c.l.b16 %v226
  %v1242 = vunpack.c.l.b16 %v227
  %v1243 = vunpack.c.l.b16 %v228
  %v1244 = vunpack.c.l.b16 %v229
  %v1245 = vunpack.c.l.b16 %v230
  %v1246 = vunpack.c.l.b16 %v231
  %v1247 = vunpack.c.l.b16 %v232
  %v1248 = vunpack.c.l.b16 %v233
  %v1249 = vunpack.c.l.b16 %v234
  %v1250 = vunpack.c.l.b16 %v235
  %v1251 = vunpack.c.l.b16 %v236
  %v1252 = vunpack.c.l.b16 %v237
  %v1253 = vunpack.c.l.b16 %v238
  %v1254 = vunpack.c.l.b16 %v239
  %v1255 = vunpack.c.l.b16 %v240
  %v1256 = vunpack.c.l.b16 %v241
  %v1257 = vunpack.c.l.b16 %v242
  %v1258 = vunpack.c.l.b16 %v243
  %v1259 = vunpack.c.l.b16 %v244
  %v1260 = vunpack.c.l.b16 %v245
  %v1261 = vunpack.c.l.b16 %v246
  %v1262 = vunpack.c.l.b16 %v247
  %v1263 = vunpack.c.l.b16 %v248
  %v1264 = vunpack.c.l.b16 %v249
  %v1265 = vunpack.c.l.b16 %v250
  %v1266 = vunpack.c.l.b16 %v251
  %v1267 = vunpack.c.l.b16 %v252
  %v1268 = vunpack.c.l.b16 %v253
  %v1269 = vunpack.c.l.b16 %v254
  %v1270 = vunpack.c.l.b16 %v255
  %v1271 = vunpack.c.l.b16 %v256
  %v1272 = vunpack.c.l.b16 %v257
  %v1273 = vunpack.c.l.b16 %v258
  %v1274 = vunpack.c.l.b16 %v259
  %v1275 = vunpack.c.l.b16 %v260
  %v1276 = vunpack.c.l.b16 %v261
  %v1277 = vunpack.c.l.b16 %v262
  %v1278 = vunpack.c.l.b16 %v263
  %v1279 = vunpack.c.l.b16 %v264
  %v1280 = vunpack.c.l.b16 %v265
  %v1281 = vunpack.c.l.b16 %v266
  %v1282 = vunpack.c.l.b16 %v267
  %v1283 = vunpack.c.l.b16 %v268
  %v1284 = vunpack.c.l.b16 %v269
  %v1285 = vunpack.c.l.b16 %v270
  %v1286 = vunpack.c.l.b16 %v271
  %v1287 = vunpack.c.l.b16 %v272
  %v1288 = vunpack.c.l.b16 %v273
  %v1289 = vunpack.c.l.b16 %v274
  %v1290 = vunpack.c.l.b16 %v275
  %v1291 = vunpack.c.l.b16 %v276
  %v1292 = vunpack.c.l.b16 %v277
  %v1293 = vunpack.c.l.b16 %v278
  %v1294 = vunpack.c.l.b16 %v279
  %v1295 = vunpack.c.l.b16 %v280
  %v1296 = vunpack.c.l.b16 %v281
  %v1297 = vunpack.c.l.b16 %v282
  %v1298 = vunpack.c.l.b16 %v283
  %v1299 = vunpack.c.l.b16 %v284
  %v1300 = vunpack.c.l.b16 %v285
  %v1301 = vunpack.c.l.b16 %v286
  %v1302 = vunpack.c.l.b16 %v287
  %v1303 = vunpack.c.l.b16 %v288
  %v1304 = vunpack.c.l.b16 %v289
  %v1305 = vunpack.c.l.b16 %v290
  %v1306 = vunpack.c.l.b16 %v291
  %v1307 = vunpack.c.l.b16 %v292
  %v1308 = vunpack.c.l.b16 %v293
  %v1309 = vunpack.c.l.b16 %v294
  %v1310 = vunpack.c.l.b16 %v295
  %v1311 = vunpack.c.l.b16 %v296
  %v1312 = vunpack.c.l.b16 %v297
  %v1313 = vunpack.c.l.b16 %v298
  %v1314 = vunpack.c.l.b16 %v299
  %v1315 = vunpack.c.l.b16 %v300
  %v1316 = vunpack.c.l.b16 %v301
  %v1317 = vunpack.c.l.b16 %v302
  %v1318 = vunpack.c.l.b16 %v303
  %v1319 = vunpack.c.l.b16 %v304
  %v1320 = vunpack.c.l.b16 %v305
  %v1321 = vunpack.c.l.b16 %v306
  %v1322 = vunpack.c.l.b16 %v307
  %v1323 = vunpack.c.l.b16 %v308
  %v1324 = vunpack.c.l.b16 %v309
  %v1325 = vunpack.c.l.b16 %v310
  %v1326 = vunpack.c.l.b16 %v311
  %v1327 = vunpack.c.l.b16 %v312
  %v1328 = vunpack.c.l.b16 %v313
  %v1329 = vunpack.c.l.b16 %v314
  %v1330 = vunpack.c.l.b16 %v315
  %v1331 = vunpack.c.l.b16 %v316
  %v1332 = vunpack.c.l.b16 %v317
  %v1333 = vunpack.c.l.b16 %v318
  %v1334 = vunpack.c.l.b16 %v319
  %v1335 = vunpack.c.l.b16 %v320
  %v1336 = vunpack.c.l.b16 %v321
  %v1337 = vunpack.c.l.b16 %v322
  %v1338 = vunpack.c.l.b16 %v323
  %v1339 = vunpack.c.l.b16 %v324
  %v1340 = vunpack.c.l.b16 %v325
  %v1341 = vunpack.c.l.b16 %v326
  %v1342 = vunpack.c.l.b16 %v327
  %v1343 = vunpack.c.l.b16 %v328
  %v1344 = vunpack.c.l.b16 %v329
  %v1345 = vunpack.c.l.b16 %v330
  %v1346 = vunpack.c.l.b16 %v331
  %v1347 = vunpack.c.l.b16 %v332
  %v1348 = vunpack.c.l.b16 %v333
  %v1349 = vunpack.c.l.b16 %v334
  %v1350 = vunpack.c.l.b16 %v335
  %v1351 = vunpack.c.l.b16 %v336
  %v1352 = vunpack.c.l.b16 %v337
  %v1353 = vunpack.c.l.b16 %v338
  %v1354 = vunpack.c.l.b16 %v339
  %v1355 = vunpack.c.l.b16 %v340
  %v1356 = vunpack.c.l.b16 %v341
  %v1357 = vunpack.c.l.b16 %v342
  %v1358 = vunpack.c.l.b16 %v343
  %v1359 = vunpack.c.l.b16 %v344
  %v1360 = vunpack.c.l.b16 %v345
  %v1361 = vunpack.c.l.b16 %v346
  %v1362 = vunpack.c.l.b16 %v347
  %v1363 = vunpack.c.l.b16 %v348
  %v1364 = vunpack.c.l.b16 %v349
  %v1365 = vunpack.c.l.b16 %v350
  %v1366 = vpack.c.b16 %v1143, %v1142
  %v1367 = vpack.c.b16 %v1145, %v1144
  %v1368 = vpack.c.b16 %v1147, %v1146
  %v1369 = vpack.c.b16 %v1149, %v1148
  %v1370 = vpack.c.b16 %v1151, %v1150
  %v1371 = vpack.c.b16 %v1153, %v1152
  %v1372 = vpack.c.b16 %v1155, %v1154
  %v1373 = vpack.c.b16 %v1157, %v1156
  %v1374 = vpack.c.b16 %v1159, %v1158
  %v1375 = vpack.c.b16 %v1161, %v1160
  %v1376 = vpack.c.b16 %v1163, %v1162
  %v1377 = vpack.c.b16 %v1165, %v1164
  %v1378 = vpack.c.b16 %v1167, %v1166
  %v1379 = vpack.c.b16 %v1169, %v1168
  %v1380 = vpack.c.b16 %v1171, %v1170
  %v1381 = vpack.c.b16 %v1173, %v1172
  %v1382 = vpack.c.b16 %v1175, %v1174
  %v1383 = vpack.c.b16 %v1177, %v1176
  %v1384 = vpack.c.b16 %v1179, %v1178
  %v1385 = vpack.c.b16 %v1181, %v1180
  %v1386 = vpack.c.b16 %v1183, %v1182
  %v1387 = vpack.c.b16 %v1185, %v1184
  %v1388 = vpack.c.b16 %v1187, %v1186
  %v1389 = vpack.c.b16 %v1189, %v1188
  %v1390 = vpack.c.b16 %v1191, %v1190
  %v1391 = vpack.c.b16 %v1193, %v1192
  %v1392 = vpack.c.b16 %v1195, %v1194
  %v1393 = vpack.c.b16 %v1197, %v1196
  %v1394 = vpack.c.b16 %v1199, %v1198
  %v1395 = vpack.c.b16 %v1201, %v1200
  %v1396 = vpack.c.b16 %v1203, %v1202
  %v1397 = vpack.c.b16 %v1205, %v1204
  %v1398 = vpack.c.b16 %v1207, %v1206
  %v1399 = vpack.c.b16 %v1209, %v1208
  %v1400 = vpack.c.b16 %v1211, %v1210
  %v1401 = vpack.c.b16 %v1213, %v1212
  %v1402 = vpack.c.b16 %v1215, %v1214
  %v1403 = vpack.c.b16 %v1217, %v1216
  %v1404 = vpack.c.b16 %v1219, %v1218
  %v1405 = vpack.c.b16 %v1221, %v1220
  %v1406 = vpack.c.b16 %v1223, %v1222
  %v1407 = vpack.c.b16 %v1225, %v1224
  %v1408 = vpack.c.b16 %v1227, %v1226
  %v1409 = vpack.c.b16 %v1229, %v1228
  %v1410 = vpack.c.b16 %v1231, %v1230
  %v1411 = vpack.c.b16 %v1233, %v1232
  %v1412 = vpack.c.b16 %v1235, %v1234
  %v1413 = vpack.c.b16 %v1237, %v1236
  %v1414 = vpack.c.b16 %v1239, %v1238
  %v1415 = vpack.c.b16 %v1241, %v1240
  %v1416 = vpack.c.b16 %v1243, %v1242
  %v1417 = vpack.c.b16 %v1245, %v1244
  %v1418 = vpack.c.b16 %v1247, %v1246
  %v1419 = vpack.c.b16 %v1249, %v1248
  %v1420 = vpack.c.b16 %v1251, %v1250
  %v1421 = vpack.c.b16 %v1253, %v1252
  %v1422 = vpack.c.b16 %v1255, %v1254
  %v1423 = vpack.c.b16 %v1257, %v1256
  %v1424 = vpack.c.b16 %v1259, %v1258
  %v1425 = vpack.c.b16 %v1261, %v1260
  %v1426 = vpack.c.b16 %v1263, %v1262
  %v1427 = vpack.c.b16 %v1265, %v1264
  %v1428 = vpack.c.b16 %v1267, %v1266
  %v1429 = vpack.c.b16 %v1269, %v1268
  %v1430 = vpack.c.b16 %v1271, %v1270
  %v1431 = vpack.c.b16 %v1273, %v1272
  %v1432 = vpack.c.b16 %v1275, %v1274
  %v1433 = vpack.c.b16 %v1277, %v1276
  %v1434 = vpack.c.b16 %v1279, %v1278
  %v1435 = vpack.c.b16 %v1281, %v1280
  %v1436 = vpack.c.b16 %v1283, %v1282
  %v1437 = vpack.c.b16 %v1285, %v1284
  %v1438 = vpack.c.b16 %v1287, %v1286
  %v1439 = vpack.c.b16 %v1289, %v1288
  %v1440 = vpack.c.b16 %v1291, %v1290
  %v1441 = vpack.c.b16 %v1293, %v1292
  %v1442 = vpack.c.b16 %v1295, %v1294
  %v1443 = vpack.c.b16 %v1297, %v1296
  %v1444 = vpack.c.b16 %v1299, %v1298
  %v1445 = vpack.c.b16 %v1301, %v1300
  %v1446 = vpack.c.b16 %v1303, %v1302
  %v1447 = vpack.c.b16 %v1305, %v1304
  %v1448 = vpack.c.b16 %v1307, %v1306
  %v1449 = vpack.c.b16 %v1309, %v1308
  %v1450 = vpack.c.b16 %v1311, %v1310
  %v1451 = vpack.c.b16 %v1313, %v1312
  %v1452 = vpack.c.b16 %v1315, %v1314
  %v1453 = vpack.c.b16 %v1317, %v1316
  %v1454 = vpack.c.b16 %v1319, %v1318
  %v1455 = vpack.c.b16 %v1321, %v1320
  %v1456 = vpack.c.b16 %v1323, %v1322
  %v1457 = vpack.c.b16 %v1325, %v1324
  %v1458 = vpack.c.b16 %v1327, %v1326
  %v1459 = vpack.c.b16 %v1329, %v1328
  %v1460 = vpack.c.b16 %v1331, %v1330
  %v1461 = vpack.c.b16 %v1333, %v1332
  %v1462 = vpack.c.b16 %v1335, %v1334
  %v1463 = vpack.c.b16 %v1337, %v1336
  %v1464 = vpack.c.b16 %v1339, %v1338
  %v1465 = vpack.c.b16 %v1341, %v1340
  %v1466 = vpack.c.b16 %v1343, %v1342
  %v1467 = vpack.c.b16 %v1345, %v1344
  %v1468 = vpack.c.b16 %v1347, %v1346
  %v1469 = vpack.c.b16 %v1349, %v1348
  %v1470 = vpack.c.b16 %v1351, %v1350
  %v1471 = vpack.c.b16 %v1353, %v1352
  %v1472 = vpack.c.b16 %v1355, %v1354
  %v1473 = vpack.c.b16 %v1357, %v1356
  %v1474 = vpack.c.b16 %v1359, %v1358
  %v1475 = vpack.c.b16 %v1361, %v1360
  %v1476 = vpack.c.b16 %v1363, %v1362
  %v1477 = vpack.c.b16 %v1365, %v1364
  %1590 = vmatprep.subr.bf16.mxu0 0
  %1591 = vmatpush1.bf16.msra.mxu0 %v1366
  %1592 = vmatprep.subr.bf16.mxu0 0
  %1593 = vmatpush1.bf16.msra.mxu0 %v1367
  %1594 = vmatprep.subr.bf16.mxu0 0
  %1595 = vmatpush1.bf16.msra.mxu0 %v1368
  %1596 = vmatprep.subr.bf16.mxu0 0
  %1597 = vmatpush1.bf16.msra.mxu0 %v1369
  %1598 = vmatprep.subr.bf16.mxu0 0
  %1599 = vmatpush1.bf16.msra.mxu0 %v1370
  %1600 = vmatprep.subr.bf16.mxu0 0
  %1601 = vmatpush1.bf16.msra.mxu0 %v1371
  %1602 = vmatprep.subr.bf16.mxu0 0
  %1603 = vmatpush1.bf16.msra.mxu0 %v1372
  %1604 = vmatprep.subr.bf16.mxu0 0
  %1605 = vmatpush1.bf16.msra.mxu0 %v1373
  %1606 = vmatprep.subr.bf16.mxu0 0
  %1607 = vmatpush1.bf16.msra.mxu0 %v1374
  %1608 = vmatprep.subr.bf16.mxu0 0
  %1609 = vmatpush1.bf16.msra.mxu0 %v1375
  %1610 = vmatprep.subr.bf16.mxu0 0
  %1611 = vmatpush1.bf16.msra.mxu0 %v1376
  %1612 = vmatprep.subr.bf16.mxu0 0
  %1613 = vmatpush1.bf16.msra.mxu0 %v1377
  %1614 = vmatprep.subr.bf16.mxu0 0
  %1615 = vmatpush1.bf16.msra.mxu0 %v1378
  %1616 = vmatprep.subr.bf16.mxu0 0
  %1617 = vmatpush1.bf16.msra.mxu0 %v1379
  %1618 = vmatprep.subr.bf16.mxu0 0
  %1619 = vmatpush1.bf16.msra.mxu0 %v1380
  %1620 = vmatprep.subr.bf16.mxu0 0
  %1621 = vmatpush1.bf16.msra.mxu0 %v1381
  %1622 = vmatprep.mubr.bf16.mxu0 %v695
  %1623 = vmatmul.mubr.bf16.gmra.mrb[0].mxu0 %v694
  %v1624 = vpop.f32.mrb[0].mxu0
  %v1625 = vadd.f32 %v356, %v1624
  %v1626 = vpop.f32.mrb[0].mxu0
  %v1627 = vpop.f32.mrb[0].mxu0
  %v1628 = vadd.f32 %v356, %v1627
  %v1629 = vpop.f32.mrb[0].mxu0
  %1630 = vmatprep.mubr.bf16.mxu0 %v709
  %1631 = vmatmul.mubr.bf16.gmra.mrb[0].mxu0 %v708
  %v1632 = vpop.f32.mrb[0].mxu0
  %v1633 = vadd.f32 %v356, %v1632
  %v1634 = vpop.f32.mrb[0].mxu0
  %v1635 = vpop.f32.mrb[0].mxu0
  %v1636 = vadd.f32 %v356, %v1635
  %v1637 = vpop.f32.mrb[0].mxu0
  %1638 = vmatprep.mubr.bf16.mxu0 %v723
  %1639 = vmatmul.mubr.bf16.gmra.mrb[0].mxu0 %v722
  %v1640 = vpop.f32.mrb[0].mxu0
  %v1641 = vadd.f32 %v356, %v1640
  %v1642 = vpop.f32.mrb[0].mxu0
  %v1643 = vpop.f32.mrb[0].mxu0
  %v1644 = vadd.f32 %v356, %v1643
  %v1645 = vpop.f32.mrb[0].mxu0
  %1646 = vmatprep.mubr.bf16.mxu0 %v737
  %1647 = vmatmul.mubr.bf16.gmra.mrb[0].mxu0 %v736
  %v1648 = vpop.f32.mrb[0].mxu0
  %v1649 = vadd.f32 %v356, %v1648
  %v1650 = vpop.f32.mrb[0].mxu0
  %v1651 = vpop.f32.mrb[0].mxu0
  %v1652 = vadd.f32 %v356, %v1651
  %v1653 = vpop.f32.mrb[0].mxu0
  %1654 = vmatprep.mubr.bf16.mxu0 %v751
  %1655 = vmatmul.mubr.bf16.gmra.mrb[0].mxu0 %v750
  %v1656 = vpop.f32.mrb[0].mxu0
  %v1657 = vadd.f32 %v356, %v1656
  %v1658 = vpop.f32.mrb[0].mxu0
  %v1659 = vpop.f32.mrb[0].mxu0
  %v1660 = vadd.f32 %v356, %v1659
  %v1661 = vpop.f32.mrb[0].mxu0
  %1662 = vmatprep.mubr.bf16.mxu0 %v765
  %1663 = vmatmul.mubr.bf16.gmra.mrb[0].mxu0 %v764
  %v1664 = vpop.f32.mrb[0].mxu0
  %v1665 = vadd.f32 %v356, %v1664
  %v1666 = vpop.f32.mrb[0].mxu0
  %v1667 = vpop.f32.mrb[0].mxu0
  %v1668 = vadd.f32 %v356, %v1667
  %v1669 = vpop.f32.mrb[0].mxu0
  %1670 = vmatprep.mubr.bf16.mxu0 %v779
  %1671 = vmatmul.mubr.bf16.gmra.mrb[0].mxu0 %v778
  %v1672 = vpop.f32.mrb[0].mxu0
  %v1673 = vadd.f32 %v356, %v1672
  %v1674 = vpop.f32.mrb[0].mxu0
  %v1675 = vpop.f32.mrb[0].mxu0
  %v1676 = vadd.f32 %v356, %v1675
  %v1677 = vpop.f32.mrb[0].mxu0
  %1678 = vmatprep.mubr.bf16.mxu0 %v793
  %1679 = vmatmul.mubr.bf16.gmra.mrb[0].mxu0 %v792
  %v1680 = vpop.f32.mrb[0].mxu0
  %v1681 = vadd.f32 %v356, %v1680
  %v1682 = vpop.f32.mrb[0].mxu0
  %v1683 = vpop.f32.mrb[0].mxu0
  %v1684 = vadd.f32 %v356, %v1683
  %v1685 = vpop.f32.mrb[0].mxu0
  %1686 = vdwg.mxu0
  %1687 = vmatprep.subr.bf16.mxu0 0
  %1688 = vmatpush1.bf16.msra.mxu0 %v1382
  %1689 = vmatprep.subr.bf16.mxu0 0
  %1690 = vmatpush1.bf16.msra.mxu0 %v1383
  %1691 = vmatprep.subr.bf16.mxu0 0
  %1692 = vmatpush1.bf16.msra.mxu0 %v1384
  %1693 = vmatprep.subr.bf16.mxu0 0
  %1694 = vmatpush1.bf16.msra.mxu0 %v1385
  %1695 = vmatprep.subr.bf16.mxu0 0
  %1696 = vmatpush1.bf16.msra.mxu0 %v1386
  %1697 = vmatprep.subr.bf16.mxu0 0
  %1698 = vmatpush1.bf16.msra.mxu0 %v1387
  %1699 = vmatprep.subr.bf16.mxu0 0
  %1700 = vmatpush1.bf16.msra.mxu0 %v1388
  %1701 = vmatprep.subr.bf16.mxu0 0
  %1702 = vmatpush1.bf16.msra.mxu0 %v1389
  %1703 = vmatprep.subr.bf16.mxu0 0
  %1704 = vmatpush1.bf16.msra.mxu0 %v1390
  %1705 = vmatprep.subr.bf16.mxu0 0
  %1706 = vmatpush1.bf16.msra.mxu0 %v1391
  %1707 = vmatprep.subr.bf16.mxu0 0
  %1708 = vmatpush1.bf16.msra.mxu0 %v1392
  %1709 = vmatprep.subr.bf16.mxu0 0
  %1710 = vmatpush1.bf16.msra.mxu0 %v1393
  %1711 = vmatprep.subr.bf16.mxu0 0
  %1712 = vmatpush1.bf16.msra.mxu0 %v1394
  %1713 = vmatprep.subr.bf16.mxu0 0
  %1714 = vmatpush1.bf16.msra.mxu0 %v1395
  %1715 = vmatprep.subr.bf16.mxu0 0
  %1716 = vmatpush1.bf16.msra.mxu0 %v1396
  %1717 = vmatprep.subr.bf16.mxu0 0
  %1718 = vmatpush1.bf16.msra.mxu0 %v1397
  %1719 = vmatprep.mubr.bf16.mxu0 %v697
  %1720 = vmatmul.mubr.bf16.gmra.mrb[0].mxu0 %v696
  %v1721 = vpop.f32.mrb[0].mxu0
  %v1722 = vadd.f32 %v1625, %v1721
  %v1723 = vpop.f32.mrb[0].mxu0
  %v1724 = vpop.f32.mrb[0].mxu0
  %v1725 = vadd.f32 %v1628, %v1724
  %v1726 = vpop.f32.mrb[0].mxu0
  %1727 = vmatprep.mubr.bf16.mxu0 %v711
  %1728 = vmatmul.mubr.bf16.gmra.mrb[0].mxu0 %v710
  %v1729 = vpop.f32.mrb[0].mxu0
  %v1730 = vadd.f32 %v1633, %v1729
  %v1731 = vpop.f32.mrb[0].mxu0
  %v1732 = vpop.f32.mrb[0].mxu0
  %v1733 = vadd.f32 %v1636, %v1732
  %v1734 = vpop.f32.mrb[0].mxu0
  %1735 = vmatprep.mubr.bf16.mxu0 %v725
  %1736 = vmatmul.mubr.bf16.gmra.mrb[0].mxu0 %v724
  %v1737 = vpop.f32.mrb[0].mxu0
  %v1738 = vadd.f32 %v1641, %v1737
  %v1739 = vpop.f32.mrb[0].mxu0
  %v1740 = vpop.f32.mrb[0].mxu0
  %v1741 = vadd.f32 %v1644, %v1740
  %v1742 = vpop.f32.mrb[0].mxu0
  %1743 = vmatprep.mubr.bf16.mxu0 %v739
  %1744 = vmatmul.mubr.bf16.gmra.mrb[0].mxu0 %v738
  %v1745 = vpop.f32.mrb[0].mxu0
  %v1746 = vadd.f32 %v1649, %v1745
  %v1747 = vpop.f32.mrb[0].mxu0
  %v1748 = vpop.f32.mrb[0].mxu0
  %v1749 = vadd.f32 %v1652, %v1748
  %v1750 = vpop.f32.mrb[0].mxu0
  %1751 = vmatprep.mubr.bf16.mxu0 %v753
  %1752 = vmatmul.mubr.bf16.gmra.mrb[0].mxu0 %v752
  %v1753 = vpop.f32.mrb[0].mxu0
  %v1754 = vadd.f32 %v1657, %v1753
  %v1755 = vpop.f32.mrb[0].mxu0
  %v1756 = vpop.f32.mrb[0].mxu0
  %v1757 = vadd.f32 %v1660, %v1756
  %v1758 = vpop.f32.mrb[0].mxu0
  %1759 = vmatprep.mubr.bf16.mxu0 %v767
  %1760 = vmatmul.mubr.bf16.gmra.mrb[0].mxu0 %v766
  %v1761 = vpop.f32.mrb[0].mxu0
  %v1762 = vadd.f32 %v1665, %v1761
  %v1763 = vpop.f32.mrb[0].mxu0
  %v1764 = vpop.f32.mrb[0].mxu0
  %v1765 = vadd.f32 %v1668, %v1764
  %v1766 = vpop.f32.mrb[0].mxu0
  %1767 = vmatprep.mubr.bf16.mxu0 %v781
  %1768 = vmatmul.mubr.bf16.gmra.mrb[0].mxu0 %v780
  %v1769 = vpop.f32.mrb[0].mxu0
  %v1770 = vadd.f32 %v1673, %v1769
  %v1771 = vpop.f32.mrb[0].mxu0
  %v1772 = vpop.f32.mrb[0].mxu0
  %v1773 = vadd.f32 %v1676, %v1772
  %v1774 = vpop.f32.mrb[0].mxu0
  %1775 = vmatprep.mubr.bf16.mxu0 %v795
  %1776 = vmatmul.mubr.bf16.gmra.mrb[0].mxu0 %v794
  %v1777 = vpop.f32.mrb[0].mxu0
  %v1778 = vadd.f32 %v1681, %v1777
  %v1779 = vpop.f32.mrb[0].mxu0
  %v1780 = vpop.f32.mrb[0].mxu0
  %v1781 = vadd.f32 %v1684, %v1780
  %v1782 = vpop.f32.mrb[0].mxu0
  %1783 = vdwg.mxu0
  %1784 = vmatprep.subr.bf16.mxu0 0
  %1785 = vmatpush1.bf16.msra.mxu0 %v1398
  %1786 = vmatprep.subr.bf16.mxu0 0
  %1787 = vmatpush1.bf16.msra.mxu0 %v1399
  %1788 = vmatprep.subr.bf16.mxu0 0
  %1789 = vmatpush1.bf16.msra.mxu0 %v1400
  %1790 = vmatprep.subr.bf16.mxu0 0
  %1791 = vmatpush1.bf16.msra.mxu0 %v1401
  %1792 = vmatprep.subr.bf16.mxu0 0
  %1793 = vmatpush1.bf16.msra.mxu0 %v1402
  %1794 = vmatprep.subr.bf16.mxu0 0
  %1795 = vmatpush1.bf16.msra.mxu0 %v1403
  %1796 = vmatprep.subr.bf16.mxu0 0
  %1797 = vmatpush1.bf16.msra.mxu0 %v1404
  %1798 = vmatprep.subr.bf16.mxu0 0
  %1799 = vmatpush1.bf16.msra.mxu0 %v1405
  %1800 = vmatprep.subr.bf16.mxu0 0
  %1801 = vmatpush1.bf16.msra.mxu0 %v1406
  %1802 = vmatprep.subr.bf16.mxu0 0
  %1803 = vmatpush1.bf16.msra.mxu0 %v1407
  %1804 = vmatprep.subr.bf16.mxu0 0
  %1805 = vmatpush1.bf16.msra.mxu0 %v1408
  %1806 = vmatprep.subr.bf16.mxu0 0
  %1807 = vmatpush1.bf16.msra.mxu0 %v1409
  %1808 = vmatprep.subr.bf16.mxu0 0
  %1809 = vmatpush1.bf16.msra.mxu0 %v1410
  %1810 = vmatprep.subr.bf16.mxu0 0
  %1811 = vmatpush1.bf16.msra.mxu0 %v1411
  %1812 = vmatprep.subr.bf16.mxu0 0
  %1813 = vmatpush1.bf16.msra.mxu0 %v1412
  %1814 = vmatprep.subr.bf16.mxu0 0
  %1815 = vmatpush1.bf16.msra.mxu0 %v1413
  %1816 = vmatprep.mubr.bf16.mxu0 %v699
  %1817 = vmatmul.mubr.bf16.gmra.mrb[0].mxu0 %v698
  %v1818 = vpop.f32.mrb[0].mxu0
  %v1819 = vadd.f32 %v1722, %v1818
  %v1820 = vpop.f32.mrb[0].mxu0
  %v1821 = vpop.f32.mrb[0].mxu0
  %v1822 = vadd.f32 %v1725, %v1821
  %v1823 = vpop.f32.mrb[0].mxu0
  %1824 = vmatprep.mubr.bf16.mxu0 %v713
  %1825 = vmatmul.mubr.bf16.gmra.mrb[0].mxu0 %v712
  %v1826 = vpop.f32.mrb[0].mxu0
  %v1827 = vadd.f32 %v1730, %v1826
  %v1828 = vpop.f32.mrb[0].mxu0
  %v1829 = vpop.f32.mrb[0].mxu0
  %v1830 = vadd.f32 %v1733, %v1829
  %v1831 = vpop.f32.mrb[0].mxu0
  %1832 = vmatprep.mubr.bf16.mxu0 %v727
  %1833 = vmatmul.mubr.bf16.gmra.mrb[0].mxu0 %v726
  %v1834 = vpop.f32.mrb[0].mxu0
  %v1835 = vadd.f32 %v1738, %v1834
  %v1836 = vpop.f32.mrb[0].mxu0
  %v1837 = vpop.f32.mrb[0].mxu0
  %v1838 = vadd.f32 %v1741, %v1837
  %v1839 = vpop.f32.mrb[0].mxu0
  %1840 = vmatprep.mubr.bf16.mxu0 %v741
  %1841 = vmatmul.mubr.bf16.gmra.mrb[0].mxu0 %v740
  %v1842 = vpop.f32.mrb[0].mxu0
  %v1843 = vadd.f32 %v1746, %v1842
  %v1844 = vpop.f32.mrb[0].mxu0
  %v1845 = vpop.f32.mrb[0].mxu0
  %v1846 = vadd.f32 %v1749, %v1845
  %v1847 = vpop.f32.mrb[0].mxu0
  %1848 = vmatprep.mubr.bf16.mxu0 %v755
  %1849 = vmatmul.mubr.bf16.gmra.mrb[0].mxu0 %v754
  %v1850 = vpop.f32.mrb[0].mxu0
  %v1851 = vadd.f32 %v1754, %v1850
  %v1852 = vpop.f32.mrb[0].mxu0
  %v1853 = vpop.f32.mrb[0].mxu0
  %v1854 = vadd.f32 %v1757, %v1853
  %v1855 = vpop.f32.mrb[0].mxu0
  %1856 = vmatprep.mubr.bf16.mxu0 %v769
  %1857 = vmatmul.mubr.bf16.gmra.mrb[0].mxu0 %v768
  %v1858 = vpop.f32.mrb[0].mxu0
  %v1859 = vadd.f32 %v1762, %v1858
  %v1860 = vpop.f32.mrb[0].mxu0
  %v1861 = vpop.f32.mrb[0].mxu0
  %v1862 = vadd.f32 %v1765, %v1861
  %v1863 = vpop.f32.mrb[0].mxu0
  %1864 = vmatprep.mubr.bf16.mxu0 %v783
  %1865 = vmatmul.mubr.bf16.gmra.mrb[0].mxu0 %v782
  %v1866 = vpop.f32.mrb[0].mxu0
  %v1867 = vadd.f32 %v1770, %v1866
  %v1868 = vpop.f32.mrb[0].mxu0
  %v1869 = vpop.f32.mrb[0].mxu0
  %v1870 = vadd.f32 %v1773, %v1869
  %v1871 = vpop.f32.mrb[0].mxu0
  %1872 = vmatprep.mubr.bf16.mxu0 %v797
  %1873 = vmatmul.mubr.bf16.gmra.mrb[0].mxu0 %v796
  %v1874 = vpop.f32.mrb[0].mxu0
  %v1875 = vadd.f32 %v1778, %v1874
  %v1876 = vpop.f32.mrb[0].mxu0
  %v1877 = vpop.f32.mrb[0].mxu0
  %v1878 = vadd.f32 %v1781, %v1877
  %v1879 = vpop.f32.mrb[0].mxu0
  %1880 = vdwg.mxu0
  %1881 = vmatprep.subr.bf16.mxu0 0
  %1882 = vmatpush1.bf16.msra.mxu0 %v1414
  %1883 = vmatprep.subr.bf16.mxu0 0
  %1884 = vmatpush1.bf16.msra.mxu0 %v1415
  %1885 = vmatprep.subr.bf16.mxu0 0
  %1886 = vmatpush1.bf16.msra.mxu0 %v1416
  %1887 = vmatprep.subr.bf16.mxu0 0
  %1888 = vmatpush1.bf16.msra.mxu0 %v1417
  %1889 = vmatprep.subr.bf16.mxu0 0
  %1890 = vmatpush1.bf16.msra.mxu0 %v1418
  %1891 = vmatprep.subr.bf16.mxu0 0
  %1892 = vmatpush1.bf16.msra.mxu0 %v1419
  %1893 = vmatprep.subr.bf16.mxu0 0
  %1894 = vmatpush1.bf16.msra.mxu0 %v1420
  %1895 = vmatprep.subr.bf16.mxu0 0
  %1896 = vmatpush1.bf16.msra.mxu0 %v1421
  %1897 = vmatprep.subr.bf16.mxu0 0
  %1898 = vmatpush1.bf16.msra.mxu0 %v1422
  %1899 = vmatprep.subr.bf16.mxu0 0
  %1900 = vmatpush1.bf16.msra.mxu0 %v1423
  %1901 = vmatprep.subr.bf16.mxu0 0
  %1902 = vmatpush1.bf16.msra.mxu0 %v1424
  %1903 = vmatprep.subr.bf16.mxu0 0
  %1904 = vmatpush1.bf16.msra.mxu0 %v1425
  %1905 = vmatprep.subr.bf16.mxu0 0
  %1906 = vmatpush1.bf16.msra.mxu0 %v1426
  %1907 = vmatprep.subr.bf16.mxu0 0
  %1908 = vmatpush1.bf16.msra.mxu0 %v1427
  %1909 = vmatprep.subr.bf16.mxu0 0
  %1910 = vmatpush1.bf16.msra.mxu0 %v1428
  %1911 = vmatprep.subr.bf16.mxu0 0
  %1912 = vmatpush1.bf16.msra.mxu0 %v1429
  %1913 = vmatprep.mubr.bf16.mxu0 %v701
  %1914 = vmatmul.mubr.bf16.gmra.mrb[0].mxu0 %v700
  %v1915 = vpop.f32.mrb[0].mxu0
  %v1916 = vadd.f32 %v1819, %v1915
  %v1917 = vpop.f32.mrb[0].mxu0
  %v1918 = vpop.f32.mrb[0].mxu0
  %v1919 = vadd.f32 %v1822, %v1918
  %v1920 = vpop.f32.mrb[0].mxu0
  %1921 = vmatprep.mubr.bf16.mxu0 %v715
  %1922 = vmatmul.mubr.bf16.gmra.mrb[0].mxu0 %v714
  %v1923 = vpop.f32.mrb[0].mxu0
  %v1924 = vadd.f32 %v1827, %v1923
  %v1925 = vpop.f32.mrb[0].mxu0
  %v1926 = vpop.f32.mrb[0].mxu0
  %v1927 = vadd.f32 %v1830, %v1926
  %v1928 = vpop.f32.mrb[0].mxu0
  %1929 = vmatprep.mubr.bf16.mxu0 %v729
  %1930 = vmatmul.mubr.bf16.gmra.mrb[0].mxu0 %v728
  %v1931 = vpop.f32.mrb[0].mxu0
  %v1932 = vadd.f32 %v1835, %v1931
  %v1933 = vpop.f32.mrb[0].mxu0
  %v1934 = vpop.f32.mrb[0].mxu0
  %v1935 = vadd.f32 %v1838, %v1934
  %v1936 = vpop.f32.mrb[0].mxu0
  %1937 = vmatprep.mubr.bf16.mxu0 %v743
  %1938 = vmatmul.mubr.bf16.gmra.mrb[0].mxu0 %v742
  %v1939 = vpop.f32.mrb[0].mxu0
  %v1940 = vadd.f32 %v1843, %v1939
  %v1941 = vpop.f32.mrb[0].mxu0
  %v1942 = vpop.f32.mrb[0].mxu0
  %v1943 = vadd.f32 %v1846, %v1942
  %v1944 = vpop.f32.mrb[0].mxu0
  %1945 = vmatprep.mubr.bf16.mxu0 %v757
  %1946 = vmatmul.mubr.bf16.gmra.mrb[0].mxu0 %v756
  %v1947 = vpop.f32.mrb[0].mxu0
  %v1948 = vadd.f32 %v1851, %v1947
  %v1949 = vpop.f32.mrb[0].mxu0
  %v1950 = vpop.f32.mrb[0].mxu0
  %v1951 = vadd.f32 %v1854, %v1950
  %v1952 = vpop.f32.mrb[0].mxu0
  %1953 = vmatprep.mubr.bf16.mxu0 %v771
  %1954 = vmatmul.mubr.bf16.gmra.mrb[0].mxu0 %v770
  %v1955 = vpop.f32.mrb[0].mxu0
  %v1956 = vadd.f32 %v1859, %v1955
  %v1957 = vpop.f32.mrb[0].mxu0
  %v1958 = vpop.f32.mrb[0].mxu0
  %v1959 = vadd.f32 %v1862, %v1958
  %v1960 = vpop.f32.mrb[0].mxu0
  %1961 = vmatprep.mubr.bf16.mxu0 %v785
  %1962 = vmatmul.mubr.bf16.gmra.mrb[0].mxu0 %v784
  %v1963 = vpop.f32.mrb[0].mxu0
  %v1964 = vadd.f32 %v1867, %v1963
  %v1965 = vpop.f32.mrb[0].mxu0
  %v1966 = vpop.f32.mrb[0].mxu0
  %v1967 = vadd.f32 %v1870, %v1966
  %v1968 = vpop.f32.mrb[0].mxu0
  %1969 = vmatprep.mubr.bf16.mxu0 %v799
  %1970 = vmatmul.mubr.bf16.gmra.mrb[0].mxu0 %v798
  %v1971 = vpop.f32.mrb[0].mxu0
  %v1972 = vadd.f32 %v1875, %v1971
  %v1973 = vpop.f32.mrb[0].mxu0
  %v1974 = vpop.f32.mrb[0].mxu0
  %v1975 = vadd.f32 %v1878, %v1974
  %v1976 = vpop.f32.mrb[0].mxu0
  %1977 = vdwg.mxu0
  %1978 = vmatprep.subr.bf16.mxu0 0
  %1979 = vmatpush1.bf16.msra.mxu0 %v1430
  %1980 = vmatprep.subr.bf16.mxu0 0
  %1981 = vmatpush1.bf16.msra.mxu0 %v1431
  %1982 = vmatprep.subr.bf16.mxu0 0
  %1983 = vmatpush1.bf16.msra.mxu0 %v1432
  %1984 = vmatprep.subr.bf16.mxu0 0
  %1985 = vmatpush1.bf16.msra.mxu0 %v1433
  %1986 = vmatprep.subr.bf16.mxu0 0
  %1987 = vmatpush1.bf16.msra.mxu0 %v1434
  %1988 = vmatprep.subr.bf16.mxu0 0
  %1989 = vmatpush1.bf16.msra.mxu0 %v1435
  %1990 = vmatprep.subr.bf16.mxu0 0
  %1991 = vmatpush1.bf16.msra.mxu0 %v1436
  %1992 = vmatprep.subr.bf16.mxu0 0
  %1993 = vmatpush1.bf16.msra.mxu0 %v1437
  %1994 = vmatprep.subr.bf16.mxu0 0
  %1995 = vmatpush1.bf16.msra.mxu0 %v1438
  %1996 = vmatprep.subr.bf16.mxu0 0
  %1997 = vmatpush1.bf16.msra.mxu0 %v1439
  %1998 = vmatprep.subr.bf16.mxu0 0
  %1999 = vmatpush1.bf16.msra.mxu0 %v1440
  %2000 = vmatprep.subr.bf16.mxu0 0
  %2001 = vmatpush1.bf16.msra.mxu0 %v1441
  %2002 = vmatprep.subr.bf16.mxu0 0
  %2003 = vmatpush1.bf16.msra.mxu0 %v1442
  %2004 = vmatprep.subr.bf16.mxu0 0
  %2005 = vmatpush1.bf16.msra.mxu0 %v1443
  %2006 = vmatprep.subr.bf16.mxu0 0
  %2007 = vmatpush1.bf16.msra.mxu0 %v1444
  %2008 = vmatprep.subr.bf16.mxu0 0
  %2009 = vmatpush1.bf16.msra.mxu0 %v1445
  %2010 = vmatprep.mubr.bf16.mxu0 %v703
  %2011 = vmatmul.mubr.bf16.gmra.mrb[0].mxu0 %v702
  %v2012 = vpop.f32.mrb[0].mxu0
  %v2013 = vadd.f32 %v1916, %v2012
  %v2014 = vpop.f32.mrb[0].mxu0
  %v2015 = vpop.f32.mrb[0].mxu0
  %v2016 = vadd.f32 %v1919, %v2015
  %v2017 = vpop.f32.mrb[0].mxu0
  %2018 = vmatprep.mubr.bf16.mxu0 %v717
  %2019 = vmatmul.mubr.bf16.gmra.mrb[0].mxu0 %v716
  %v2020 = vpop.f32.mrb[0].mxu0
  %v2021 = vadd.f32 %v1924, %v2020
  %v2022 = vpop.f32.mrb[0].mxu0
  %v2023 = vpop.f32.mrb[0].mxu0
  %v2024 = vadd.f32 %v1927, %v2023
  %v2025 = vpop.f32.mrb[0].mxu0
  %2026 = vmatprep.mubr.bf16.mxu0 %v731
  %2027 = vmatmul.mubr.bf16.gmra.mrb[0].mxu0 %v730
  %v2028 = vpop.f32.mrb[0].mxu0
  %v2029 = vadd.f32 %v1932, %v2028
  %v2030 = vpop.f32.mrb[0].mxu0
  %v2031 = vpop.f32.mrb[0].mxu0
  %v2032 = vadd.f32 %v1935, %v2031
  %v2033 = vpop.f32.mrb[0].mxu0
  %2034 = vmatprep.mubr.bf16.mxu0 %v745
  %2035 = vmatmul.mubr.bf16.gmra.mrb[0].mxu0 %v744
  %v2036 = vpop.f32.mrb[0].mxu0
  %v2037 = vadd.f32 %v1940, %v2036
  %v2038 = vpop.f32.mrb[0].mxu0
  %v2039 = vpop.f32.mrb[0].mxu0
  %v2040 = vadd.f32 %v1943, %v2039
  %v2041 = vpop.f32.mrb[0].mxu0
  %2042 = vmatprep.mubr.bf16.mxu0 %v759
  %2043 = vmatmul.mubr.bf16.gmra.mrb[0].mxu0 %v758
  %v2044 = vpop.f32.mrb[0].mxu0
  %v2045 = vadd.f32 %v1948, %v2044
  %v2046 = vpop.f32.mrb[0].mxu0
  %v2047 = vpop.f32.mrb[0].mxu0
  %v2048 = vadd.f32 %v1951, %v2047
  %v2049 = vpop.f32.mrb[0].mxu0
  %2050 = vmatprep.mubr.bf16.mxu0 %v773
  %2051 = vmatmul.mubr.bf16.gmra.mrb[0].mxu0 %v772
  %v2052 = vpop.f32.mrb[0].mxu0
  %v2053 = vadd.f32 %v1956, %v2052
  %v2054 = vpop.f32.mrb[0].mxu0
  %v2055 = vpop.f32.mrb[0].mxu0
  %v2056 = vadd.f32 %v1959, %v2055
  %v2057 = vpop.f32.mrb[0].mxu0
  %2058 = vmatprep.mubr.bf16.mxu0 %v787
  %2059 = vmatmul.mubr.bf16.gmra.mrb[0].mxu0 %v786
  %v2060 = vpop.f32.mrb[0].mxu0
  %v2061 = vadd.f32 %v1964, %v2060
  %v2062 = vpop.f32.mrb[0].mxu0
  %v2063 = vpop.f32.mrb[0].mxu0
  %v2064 = vadd.f32 %v1967, %v2063
  %v2065 = vpop.f32.mrb[0].mxu0
  %2066 = vmatprep.mubr.bf16.mxu0 %v801
  %2067 = vmatmul.mubr.bf16.gmra.mrb[0].mxu0 %v800
  %v2068 = vpop.f32.mrb[0].mxu0
  %v2069 = vadd.f32 %v1972, %v2068
  %v2070 = vpop.f32.mrb[0].mxu0
  %v2071 = vpop.f32.mrb[0].mxu0
  %v2072 = vadd.f32 %v1975, %v2071
  %v2073 = vpop.f32.mrb[0].mxu0
  %2074 = vdwg.mxu0
  %2075 = vmatprep.subr.bf16.mxu0 0
  %2076 = vmatpush1.bf16.msra.mxu0 %v1446
  %2077 = vmatprep.subr.bf16.mxu0 0
  %2078 = vmatpush1.bf16.msra.mxu0 %v1447
  %2079 = vmatprep.subr.bf16.mxu0 0
  %2080 = vmatpush1.bf16.msra.mxu0 %v1448
  %2081 = vmatprep.subr.bf16.mxu0 0
  %2082 = vmatpush1.bf16.msra.mxu0 %v1449
  %2083 = vmatprep.subr.bf16.mxu0 0
  %2084 = vmatpush1.bf16.msra.mxu0 %v1450
  %2085 = vmatprep.subr.bf16.mxu0 0
  %2086 = vmatpush1.bf16.msra.mxu0 %v1451
  %2087 = vmatprep.subr.bf16.mxu0 0
  %2088 = vmatpush1.bf16.msra.mxu0 %v1452
  %2089 = vmatprep.subr.bf16.mxu0 0
  %2090 = vmatpush1.bf16.msra.mxu0 %v1453
  %2091 = vmatprep.subr.bf16.mxu0 0
  %2092 = vmatpush1.bf16.msra.mxu0 %v1454
  %2093 = vmatprep.subr.bf16.mxu0 0
  %2094 = vmatpush1.bf16.msra.mxu0 %v1455
  %2095 = vmatprep.subr.bf16.mxu0 0
  %2096 = vmatpush1.bf16.msra.mxu0 %v1456
  %2097 = vmatprep.subr.bf16.mxu0 0
  %2098 = vmatpush1.bf16.msra.mxu0 %v1457
  %2099 = vmatprep.subr.bf16.mxu0 0
  %2100 = vmatpush1.bf16.msra.mxu0 %v1458
  %2101 = vmatprep.subr.bf16.mxu0 0
  %2102 = vmatpush1.bf16.msra.mxu0 %v1459
  %2103 = vmatprep.subr.bf16.mxu0 0
  %2104 = vmatpush1.bf16.msra.mxu0 %v1460
  %2105 = vmatprep.subr.bf16.mxu0 0
  %2106 = vmatpush1.bf16.msra.mxu0 %v1461
  %2107 = vmatprep.mubr.bf16.mxu0 %v705
  %2108 = vmatmul.mubr.bf16.gmra.mrb[0].mxu0 %v704
  %v2109 = vpop.f32.mrb[0].mxu0
  %v2110 = vadd.f32 %v2013, %v2109
  %v2111 = vpop.f32.mrb[0].mxu0
  %v2112 = vpop.f32.mrb[0].mxu0
  %v2113 = vadd.f32 %v2016, %v2112
  %v2114 = vpop.f32.mrb[0].mxu0
  %2115 = vmatprep.mubr.bf16.mxu0 %v719
  %2116 = vmatmul.mubr.bf16.gmra.mrb[0].mxu0 %v718
  %v2117 = vpop.f32.mrb[0].mxu0
  %v2118 = vadd.f32 %v2021, %v2117
  %v2119 = vpop.f32.mrb[0].mxu0
  %v2120 = vpop.f32.mrb[0].mxu0
  %v2121 = vadd.f32 %v2024, %v2120
  %v2122 = vpop.f32.mrb[0].mxu0
  %2123 = vmatprep.mubr.bf16.mxu0 %v733
  %2124 = vmatmul.mubr.bf16.gmra.mrb[0].mxu0 %v732
  %v2125 = vpop.f32.mrb[0].mxu0
  %v2126 = vadd.f32 %v2029, %v2125
  %v2127 = vpop.f32.mrb[0].mxu0
  %v2128 = vpop.f32.mrb[0].mxu0
  %v2129 = vadd.f32 %v2032, %v2128
  %v2130 = vpop.f32.mrb[0].mxu0
  %2131 = vmatprep.mubr.bf16.mxu0 %v747
  %2132 = vmatmul.mubr.bf16.gmra.mrb[0].mxu0 %v746
  %v2133 = vpop.f32.mrb[0].mxu0
  %v2134 = vadd.f32 %v2037, %v2133
  %v2135 = vpop.f32.mrb[0].mxu0
  %v2136 = vpop.f32.mrb[0].mxu0
  %v2137 = vadd.f32 %v2040, %v2136
  %v2138 = vpop.f32.mrb[0].mxu0
  %2139 = vmatprep.mubr.bf16.mxu0 %v761
  %2140 = vmatmul.mubr.bf16.gmra.mrb[0].mxu0 %v760
  %v2141 = vpop.f32.mrb[0].mxu0
  %v2142 = vadd.f32 %v2045, %v2141
  %v2143 = vpop.f32.mrb[0].mxu0
  %v2144 = vpop.f32.mrb[0].mxu0
  %v2145 = vadd.f32 %v2048, %v2144
  %v2146 = vpop.f32.mrb[0].mxu0
  %2147 = vmatprep.mubr.bf16.mxu0 %v775
  %2148 = vmatmul.mubr.bf16.gmra.mrb[0].mxu0 %v774
  %v2149 = vpop.f32.mrb[0].mxu0
  %v2150 = vadd.f32 %v2053, %v2149
  %v2151 = vpop.f32.mrb[0].mxu0
  %v2152 = vpop.f32.mrb[0].mxu0
  %v2153 = vadd.f32 %v2056, %v2152
  %v2154 = vpop.f32.mrb[0].mxu0
  %2155 = vmatprep.mubr.bf16.mxu0 %v789
  %2156 = vmatmul.mubr.bf16.gmra.mrb[0].mxu0 %v788
  %v2157 = vpop.f32.mrb[0].mxu0
  %v2158 = vadd.f32 %v2061, %v2157
  %v2159 = vpop.f32.mrb[0].mxu0
  %v2160 = vpop.f32.mrb[0].mxu0
  %v2161 = vadd.f32 %v2064, %v2160
  %v2162 = vpop.f32.mrb[0].mxu0
  %2163 = vmatprep.mubr.bf16.mxu0 %v803
  %2164 = vmatmul.mubr.bf16.gmra.mrb[0].mxu0 %v802
  %v2165 = vpop.f32.mrb[0].mxu0
  %v2166 = vadd.f32 %v2069, %v2165
  %v2167 = vpop.f32.mrb[0].mxu0
  %v2168 = vpop.f32.mrb[0].mxu0
  %v2169 = vadd.f32 %v2072, %v2168
  %v2170 = vpop.f32.mrb[0].mxu0
  %2171 = vdwg.mxu0
  %2172 = vmatprep.subr.bf16.mxu0 0
  %2173 = vmatpush1.bf16.msra.mxu0 %v1462
  %2174 = vmatprep.subr.bf16.mxu0 0
  %2175 = vmatpush1.bf16.msra.mxu0 %v1463
  %2176 = vmatprep.subr.bf16.mxu0 0
  %2177 = vmatpush1.bf16.msra.mxu0 %v1464
  %2178 = vmatprep.subr.bf16.mxu0 0
  %2179 = vmatpush1.bf16.msra.mxu0 %v1465
  %2180 = vmatprep.subr.bf16.mxu0 0
  %2181 = vmatpush1.bf16.msra.mxu0 %v1466
  %2182 = vmatprep.subr.bf16.mxu0 0
  %2183 = vmatpush1.bf16.msra.mxu0 %v1467
  %2184 = vmatprep.subr.bf16.mxu0 0
  %2185 = vmatpush1.bf16.msra.mxu0 %v1468
  %2186 = vmatprep.subr.bf16.mxu0 0
  %2187 = vmatpush1.bf16.msra.mxu0 %v1469
  %2188 = vmatprep.subr.bf16.mxu0 0
  %2189 = vmatpush1.bf16.msra.mxu0 %v1470
  %2190 = vmatprep.subr.bf16.mxu0 0
  %2191 = vmatpush1.bf16.msra.mxu0 %v1471
  %2192 = vmatprep.subr.bf16.mxu0 0
  %2193 = vmatpush1.bf16.msra.mxu0 %v1472
  %2194 = vmatprep.subr.bf16.mxu0 0
  %2195 = vmatpush1.bf16.msra.mxu0 %v1473
  %2196 = vmatprep.subr.bf16.mxu0 0
  %2197 = vmatpush1.bf16.msra.mxu0 %v1474
  %2198 = vmatprep.subr.bf16.mxu0 0
  %2199 = vmatpush1.bf16.msra.mxu0 %v1475
  %2200 = vmatprep.subr.bf16.mxu0 0
  %2201 = vmatpush1.bf16.msra.mxu0 %v1476
  %2202 = vmatprep.subr.bf16.mxu0 0
  %2203 = vmatpush1.bf16.msra.mxu0 %v1477
  %2204 = vmatprep.mubr.bf16.mxu0 %v707
  %2205 = vmatmul.mubr.bf16.gmra.mrb[0].mxu0 %v706
  %v2206 = vpop.f32.mrb[0].mxu0
  %v2207 = vadd.f32 %v2110, %v2206
  %v2208 = vpop.f32.mrb[0].mxu0
  %v2209 = vpop.f32.mrb[0].mxu0
  %v2210 = vadd.f32 %v2113, %v2209
  %v2211 = vpop.f32.mrb[0].mxu0
  %2212 = vmatprep.mubr.bf16.mxu0 %v721
  %2213 = vmatmul.mubr.bf16.gmra.mrb[0].mxu0 %v720
  %v2214 = vpop.f32.mrb[0].mxu0
  %v2215 = vadd.f32 %v2118, %v2214
  %v2216 = vpop.f32.mrb[0].mxu0
  %v2217 = vpop.f32.mrb[0].mxu0
  %v2218 = vadd.f32 %v2121, %v2217
  %v2219 = vpop.f32.mrb[0].mxu0
  %2220 = vmatprep.mubr.bf16.mxu0 %v735
  %2221 = vmatmul.mubr.bf16.gmra.mrb[0].mxu0 %v734
  %v2222 = vpop.f32.mrb[0].mxu0
  %v2223 = vadd.f32 %v2126, %v2222
  %v2224 = vpop.f32.mrb[0].mxu0
  %v2225 = vpop.f32.mrb[0].mxu0
  %v2226 = vadd.f32 %v2129, %v2225
  %v2227 = vpop.f32.mrb[0].mxu0
  %2228 = vmatprep.mubr.bf16.mxu0 %v749
  %2229 = vmatmul.mubr.bf16.gmra.mrb[0].mxu0 %v748
  %v2230 = vpop.f32.mrb[0].mxu0
  %v2231 = vadd.f32 %v2134, %v2230
  %v2232 = vpop.f32.mrb[0].mxu0
  %v2233 = vpop.f32.mrb[0].mxu0
  %v2234 = vadd.f32 %v2137, %v2233
  %v2235 = vpop.f32.mrb[0].mxu0
  %2236 = vmatprep.mubr.bf16.mxu0 %v763
  %2237 = vmatmul.mubr.bf16.gmra.mrb[0].mxu0 %v762
  %v2238 = vpop.f32.mrb[0].mxu0
  %v2239 = vadd.f32 %v2142, %v2238
  %v2240 = vpop.f32.mrb[0].mxu0
  %v2241 = vpop.f32.mrb[0].mxu0
  %v2242 = vadd.f32 %v2145, %v2241
  %v2243 = vpop.f32.mrb[0].mxu0
  %2244 = vmatprep.mubr.bf16.mxu0 %v777
  %2245 = vmatmul.mubr.bf16.gmra.mrb[0].mxu0 %v776
  %v2246 = vpop.f32.mrb[0].mxu0
  %v2247 = vadd.f32 %v2150, %v2246
  %v2248 = vpop.f32.mrb[0].mxu0
  %v2249 = vpop.f32.mrb[0].mxu0
  %v2250 = vadd.f32 %v2153, %v2249
  %v2251 = vpop.f32.mrb[0].mxu0
  %2252 = vmatprep.mubr.bf16.mxu0 %v791
  %2253 = vmatmul.mubr.bf16.gmra.mrb[0].mxu0 %v790
  %v2254 = vpop.f32.mrb[0].mxu0
  %v2255 = vadd.f32 %v2158, %v2254
  %v2256 = vpop.f32.mrb[0].mxu0
  %v2257 = vpop.f32.mrb[0].mxu0
  %v2258 = vadd.f32 %v2161, %v2257
  %v2259 = vpop.f32.mrb[0].mxu0
  %2260 = vmatprep.mubr.bf16.mxu0 %v805
  %2261 = vmatmul.mubr.bf16.gmra.mrb[0].mxu0 %v804
  %v2262 = vpop.f32.mrb[0].mxu0
  %v2263 = vadd.f32 %v2166, %v2262
  %v2264 = vpop.f32.mrb[0].mxu0
  %v2265 = vpop.f32.mrb[0].mxu0
  %v2266 = vadd.f32 %v2169, %v2265
  %v2267 = vpop.f32.mrb[0].mxu0
  %2268 = vdwg.mxu0
  %vm2269 = vcmp.ge.f32.partialorder %v2207, 0.0
  %vm2270 = vcmp.ge.f32.partialorder %v2210, 0.0
  %vm2271 = vcmp.ge.f32.partialorder %v2215, 0.0
  %vm2272 = vcmp.ge.f32.partialorder %v2218, 0.0
  %vm2273 = vcmp.ge.f32.partialorder %v2223, 0.0
  %vm2274 = vcmp.ge.f32.partialorder %v2226, 0.0
  %vm2275 = vcmp.ge.f32.partialorder %v2231, 0.0
  %vm2276 = vcmp.ge.f32.partialorder %v2234, 0.0
  %vm2277 = vcmp.ge.f32.partialorder %v2239, 0.0
  %vm2278 = vcmp.ge.f32.partialorder %v2242, 0.0
  %vm2279 = vcmp.ge.f32.partialorder %v2247, 0.0
  %vm2280 = vcmp.ge.f32.partialorder %v2250, 0.0
  %vm2281 = vcmp.ge.f32.partialorder %v2255, 0.0
  %vm2282 = vcmp.ge.f32.partialorder %v2258, 0.0
  %vm2283 = vcmp.ge.f32.partialorder %v2263, 0.0
  %vm2284 = vcmp.ge.f32.partialorder %v2266, 0.0
  %v2285 = vmul.f32 %v2207, 0.2
  %v2286 = vmul.f32 %v2210, 0.2
  %v2287 = vmul.f32 %v2215, 0.2
  %v2288 = vmul.f32 %v2218, 0.2
  %v2289 = vmul.f32 %v2223, 0.2
  %v2290 = vmul.f32 %v2226, 0.2
  %v2291 = vmul.f32 %v2231, 0.2
  %v2292 = vmul.f32 %v2234, 0.2
  %v2293 = vmul.f32 %v2239, 0.2
  %v2294 = vmul.f32 %v2242, 0.2
  %v2295 = vmul.f32 %v2247, 0.2
  %v2296 = vmul.f32 %v2250, 0.2
  %v2297 = vmul.f32 %v2255, 0.2
  %v2298 = vmul.f32 %v2258, 0.2
  %v2299 = vmul.f32 %v2263, 0.2
  %v2300 = vmul.f32 %v2266, 0.2
  %v2301 = vsel %vm2269, %v2207, %v2285
  %v2302 = vsel %vm2270, %v2210, %v2286
  %v2303 = vsel %vm2271, %v2215, %v2287
  %v2304 = vsel %vm2272, %v2218, %v2288
  %v2305 = vsel %vm2273, %v2223, %v2289
  %v2306 = vsel %vm2274, %v2226, %v2290
  %v2307 = vsel %vm2275, %v2231, %v2291
  %v2308 = vsel %vm2276, %v2234, %v2292
  %v2309 = vsel %vm2277, %v2239, %v2293
  %v2310 = vsel %vm2278, %v2242, %v2294
  %v2311 = vsel %vm2279, %v2247, %v2295
  %v2312 = vsel %vm2280, %v2250, %v2296
  %v2313 = vsel %vm2281, %v2255, %v2297
  %v2314 = vsel %vm2282, %v2258, %v2298
  %v2315 = vsel %vm2283, %v2263, %v2299
  %v2316 = vsel %vm2284, %v2266, %v2300
  %2317 = vst [vmem:[%s3] sm:$0xff] %v2301
  %2318 = vst [vmem:[%s3 + $0x8] sm:$0xff] %v2302
  %2319 = vst [vmem:[%s3 + $0x10] sm:$0xff] %v2303
  %2320 = vst [vmem:[%s3 + $0x18] sm:$0xff] %v2304
  %2321 = vst [vmem:[%s3 + $0x20] sm:$0xff] %v2305
  %2322 = vst [vmem:[%s3 + $0x28] sm:$0xff] %v2306
  %2323 = vst [vmem:[%s3 + $0x30] sm:$0xff] %v2307
  %2324 = vst [vmem:[%s3 + $0x38] sm:$0xff] %v2308
  %2325 = vst [vmem:[%s3 + $0x40] sm:$0xff] %v2309
  %2326 = vst [vmem:[%s3 + $0x48] sm:$0xff] %v2310
  %2327 = vst [vmem:[%s3 + $0x50] sm:$0xff] %v2311
  %2328 = vst [vmem:[%s3 + $0x58] sm:$0xff] %v2312
  %2329 = vst [vmem:[%s3 + $0x60] sm:$0xff] %v2313
  %2330 = vst [vmem:[%s3 + $0x68] sm:$0xff] %v2314
  %2331 = vst [vmem:[%s3 + $0x70] sm:$0xff] %v2315
  %2332 = vst [vmem:[%s3 + $0x78] sm:$0xff] %v2316
  // Predicated region
  $region14: #{_lambda_.4} parent=0 // pred_check
    _
  $region15: #{_lambda_.4} parent=0 // pred_check_branch
    %2334 = sbr.rel (0) target = $region17
  $region16: #{_lambda_.4} parent=0 // pred_region
    _
  $region17: #{_lambda_.4} parent=0 // pred_fallthru
    _
  // Predicated region
  $region18: #{_lambda_.4} parent=0 // pred_check
    _
  $region19: #{_lambda_.4} parent=0 // pred_check_branch
    %2336 = sbr.rel (0) target = $region21
  $region20: #{_lambda_.4} parent=0 // pred_region
    _
  $region21: #{_lambda_.4} parent=0 // pred_fallthru
    _

</llo_original>
